<compile_context>
chip_gen: v6e
topology: v6e:2x2x1
jax: 0.10.0
libtpu: 0.0.40
codegen_flags: <defaults>
</compile_context>

<pallas_src>
import jax
import jax.numpy as jnp
from jax import lax
from jax.experimental import pallas as pl
from jax.experimental.pallas import tpu as pltpu


def _round_up(x, m):
    return ((x + m - 1) // m) * m


def message_passing_layer(node_features, edge_features, edge_index, params,
                          n_towers=8, n_update_steps=3, tile_e=1024,
                          use_bf16=True, vmem_limit_bytes=32 * 1024 * 1024):
    """Fused GG-NN forward: n_update_steps of (MultiTowerEdge -> index_add ->
    GRUCell), then Linear -> ReLU -> Linear.  Dropout == identity (eval mode).
    On v5e/v6e (128 MiB VMEM) raise vmem_limit_bytes (~64-100 MiB) for bigger tiles."""
    N, F = node_features.shape
    E, Fe = edge_features.shape
    assert F % n_towers == 0
    D = F // n_towers
    cdt = jnp.bfloat16 if use_bf16 else jnp.float32
    cdt_bytes = 2 if use_bf16 else 4
    N_pad = _round_up(N, 8)

    # ---- edge tiling: biggest tile that fits the VMEM budget ----
    E_min = _round_up(max(E, 1), 8)
    if E_min <= tile_e:
        tile_e = E_min                 # single tile -> (1, tile_e) blocks are full-dim
    else:
        # live per-edge bytes: edge_lin/nbr_exp/prod (~F*D f32 each), nbr/msg (F),
        # two bf16 one-hot slabs (N_pad each), double-buffered edge tile + indices.
        per_edge = (3 * F * D + 2 * F) * 4 + 2 * N_pad * 2 + 2 * Fe * cdt_bytes + 16
        cap = max(128, (max(vmem_limit_bytes // 2, 1 << 20) // per_edge) // 128 * 128)
        tile_e = min(max(128, (tile_e // 128) * 128), cap)
    E_pad = _round_up(E, tile_e)
    n_tiles = E_pad // tile_e
    pad_e = E_pad - E

    # Padded edges point at node id N_pad (outside the iota range) => all-zero
    # one-hot rows => zero contribution to gather and scatter.
    src_col = jnp.concatenate([edge_index[1].astype(jnp.int32),
                               jnp.full((pad_e,), N_pad, jnp.int32)]).reshape(E_pad, 1)
    tgt_row = jnp.concatenate([edge_index[0].astype(jnp.int32),
                               jnp.full((pad_e,), N_pad, jnp.int32)]).reshape(1, E_pad)
    edge_feats = jnp.pad(edge_features, ((0, pad_e), (0, 0))).astype(cdt)
    node_pad = jnp.pad(node_features, ((0, N_pad - N), (0, 0))).astype(jnp.float32)

    # ---- edgetower weights: permute output columns (tower,i,j) -> (i,tower,j) so
    #      the neighbour expansion is a lane-concat; contract j via 0/1 `summ`. ----
    k = jnp.arange(F * D)
    i_idx = k // F
    rem = k % F
    tw_idx = rem // D
    j_idx = rem % D
    perm = tw_idx * D * D + i_idx * D + j_idx                      # new col -> old col
    w_edge = params["w_edge"][:, perm].astype(cdt)                 # (Fe, F*D)
    b_edge = params["b_edge"][:, perm].astype(jnp.float32)         # (1, F*D)
    summ = ((tw_idx * D + i_idx)[:, None] == jnp.arange(F)[None, :]).astype(cdt)

    # ---- GRU: one fused (2F, 4F) block weight on x = [agg, h]; r | z | gi_n | gh_n
    w_ih, w_hh = params["w_ih"], params["w_hh"]
    b_ih, b_hh = params["b_ih"], params["b_hh"]
    zFF = jnp.zeros((F, F), jnp.float32)
    w_gru = jnp.concatenate([
        jnp.concatenate([w_ih[:, 0:F], w_hh[:, 0:F]], axis=0),            # r
        jnp.concatenate([w_ih[:, F:2 * F], w_hh[:, F:2 * F]], axis=0),    # z
        jnp.concatenate([w_ih[:, 2 * F:3 * F], zFF], axis=0),             # gi_n (agg only)
        jnp.concatenate([zFF, w_hh[:, 2 * F:3 * F]], axis=0),             # gh_n (h only)
    ], axis=1).astype(cdt)                                                # (2F, 4F)
    gru_b = jnp.concatenate([b_ih[:, 0:F] + b_hh[:, 0:F],
                             b_ih[:, F:2 * F] + b_hh[:, F:2 * F],
                             b_ih[:, 2 * F:3 * F],
                             b_hh[:, 2 * F:3 * F]], axis=1).astype(jnp.float32)  # (1, 4F)

    w_o1 = params["w_o1"].astype(cdt)
    b_o1 = params["b_o1"].astype(jnp.float32)
    w_o2 = params["w_o2"].astype(cdt)
    b_o2 = params["b_o2"].astype(jnp.float32)

    # Cache the edge MLP output across update steps if it fits the VMEM budget.
    cache_edge_lin = (E_pad * F * D * cdt_bytes) <= max(vmem_limit_bytes // 4, 1 << 20)

    def _onehot_dot(onehot_bf16, dense_f32):
        """onehot (bf16, exact 0/1) @ dense with f32 accumulation.  f32 path: split
        the dense operand hi/lo into two bf16 passes (~exact); bf16 path: one pass."""
        if use_bf16:
            return jnp.dot(onehot_bf16, dense_f32.astype(jnp.bfloat16),
                           preferred_element_type=jnp.float32)
        hi = dense_f32.astype(jnp.bfloat16)
        lo = (dense_f32 - hi.astype(jnp.float32)).astype(jnp.bfloat16)
        return (jnp.dot(onehot_bf16, hi, preferred_element_type=jnp.float32)
                + jnp.dot(onehot_bf16, lo, preferred_element_type=jnp.float32))

    def kernel(src_ref, tgt_ref, node_ref, edge_ref,
               w_edge_ref, b_edge_ref, summ_ref,
               w_gru_ref, gru_b_ref, wo1_ref, bo1_ref, wo2_ref, bo2_ref,
               out_ref, h_scr, agg_scr, *cache):
        s = pl.program_id(0)                      # update step
        t = pl.program_id(1)                      # edge tile
        n_steps = pl.num_programs(0)
        nt = pl.num_programs(1)

        @pl.when(jnp.logical_and(s == 0, t == 0))
        def _():
            h_scr[...] = node_ref[...]

        @pl.when(t == 0)
        def _():
            agg_scr[...] = jnp.zeros_like(agg_scr)

        # ---- MultiTowerEdge edge MLP (Linear -> ReLU; Dropout == identity) ----
        def edge_mlp():
            return jnp.maximum(
                jnp.dot(edge_ref[...], w_edge_ref[...],
                        preferred_element_type=jnp.float32) + b_edge_ref[...], 0.0)

        if cache_edge_lin:
            el_scr = cache[0]

            @pl.when(s == 0)
            def _():
                el_scr[t] = edge_mlp().astype(cdt)

            edge_lin = el_scr[t].astype(jnp.float32)            # (tile_e, F*D)
        else:
            edge_lin = edge_mlp()

        # ---- one-hot gather of neighbour features: nbr[e] = h[src[e]] (MXU) ----
        iota_en = lax.broadcasted_iota(jnp.int32, (tile_e, N_pad), 1)
        onehot_src = jnp.where(iota_en == src_ref[...], 1.0, 0.0).astype(jnp.bfloat16)
        nbr = _onehot_dot(onehot_src, h_scr[...])               # (tile_e, F) f32

        # ---- per-tower mat-vec: lane-concat expansion + 0/1 contraction over j ----
        nbr_exp = jnp.concatenate([nbr] * D, axis=1)            # (tile_e, F*D)
        prod = (edge_lin * nbr_exp).astype(cdt)
        msg = jnp.dot(prod, summ_ref[...],
                      preferred_element_type=jnp.float32)       # (tile_e, F) f32

        # ---- segment-sum scatter (index_add_): duplicates sum in the contraction
        iota_ne = lax.broadcasted_iota(jnp.int32, (N_pad, tile_e), 0)
        onehot_tgt = jnp.where(iota_ne == tgt_ref[...], 1.0, 0.0).astype(jnp.bfloat16)
        agg_scr[...] = agg_scr[...] + _onehot_dot(onehot_tgt, msg)

        # ---- GRUCell update once all edge tiles of this step are aggregated ----
        @pl.when(t == nt - 1)
        def _():
            h = h_scr[...]
            x = jnp.concatenate([agg_scr[...], h], axis=1).astype(cdt)   # (N_pad, 2F)
            gates = jnp.dot(x, w_gru_ref[...],
                            preferred_element_type=jnp.float32) + gru_b_ref[...]
            r = jax.nn.sigmoid(gates[:, 0:F])
            z = jax.nn.sigmoid(gates[:, F:2 * F])
            n = jnp.tanh(gates[:, 2 * F:3 * F] + r * gates[:, 3 * F:4 * F])
            h_scr[...] = (1.0 - z) * n + z * h

        # ---- output head: Linear -> Dropout(identity) -> ReLU -> Linear ----
        @pl.when(jnp.logical_and(s == n_steps - 1, t == nt - 1))
        def _():
            hf = h_scr[...]
            o = jnp.maximum(jnp.dot(hf.astype(cdt), wo1_ref[...],
                                    preferred_element_type=jnp.float32)
                            + bo1_ref[...], 0.0)
            out_ref[...] = (jnp.dot(o.astype(cdt), wo2_ref[...],
                                    preferred_element_type=jnp.float32) + bo2_ref[...])

    def _const(shape):
        return pl.BlockSpec(shape, lambda s, t: (0,) * len(shape))

    scratch = [pltpu.VMEM((N_pad, F), jnp.float32),     # h (persists across grid steps)
               pltpu.VMEM((N_pad, F), jnp.float32)]     # per-step message aggregate
    if cache_edge_lin:
        scratch.append(pltpu.VMEM((n_tiles, tile_e, F * D), cdt))

    grid_spec = pltpu.PrefetchScalarGridSpec(
        num_scalar_prefetch=0,
        grid=(n_update_steps, n_tiles),
        in_specs=[
            pl.BlockSpec((tile_e, 1), lambda s, t: (t, 0)),       # src (gather ids)
            pl.BlockSpec((1, tile_e), lambda s, t: (0, t)),       # tgt (scatter ids)
            _const((N_pad, F)),                                   # node features
            pl.BlockSpec((tile_e, Fe), lambda s, t: (t, 0)),      # edge features
            _const((Fe, F * D)), _const((1, F * D)), _const((F * D, F)),
            _const((2 * F, 4 * F)), _const((1, 4 * F)),
            _const((F, F)), _const((1, F)), _const((F, F)), _const((1, F)),
        ],
        out_specs=_const((N_pad, F)),
        scratch_shapes=scratch,
    )

    out = pl.pallas_call(
        kernel,
        out_shape=jax.ShapeDtypeStruct((N_pad, F), jnp.float32),
        grid_spec=grid_spec,
        compiler_params=pltpu.CompilerParams(
            dimension_semantics=("arbitrary", "arbitrary"),
            vmem_limit_bytes=vmem_limit_bytes),
    )(src_col, tgt_row, node_pad, edge_feats,
      w_edge, b_edge, summ, w_gru, gru_b, w_o1, b_o1, w_o2, b_o2)
    return out[:N]


def reference(node_features, edge_features, edge_index, params,
              n_towers=8, n_update_steps=3):
    """Pure-JAX f32 replica of the PyTorch forward (eval mode) for verification."""
    N, F = node_features.shape
    E = edge_features.shape[0]
    D = F // n_towers
    h = node_features
    edge_lin = jnp.maximum(edge_features @ params["w_edge"] + params["b_edge"], 0.0)
    w_tow = edge_lin.reshape(E, n_towers, D, D)
    for _ in range(n_update_steps):
        nbr = h[edge_index[1]]
        msg = (w_tow @ nbr.reshape(E, n_towers, D, 1)).reshape(E, F)
        agg = jnp.zeros_like(h).at[edge_index[0]].add(msg)
        gi = agg @ params["w_ih"] + params["b_ih"]
        gh = h @ params["w_hh"] + params["b_hh"]
        r = jax.nn.sigmoid(gi[:, :F] + gh[:, :F])
        z = jax.nn.sigmoid(gi[:, F:2 * F] + gh[:, F:2 * F])
        n = jnp.tanh(gi[:, 2 * F:] + r * gh[:, 2 * F:])
        h = (1.0 - z) * n + z * h
    o = jnp.maximum(h @ params["w_o1"] + params["b_o1"], 0.0)
    return o @ params["w_o2"] + params["b_o2"]


if __name__ == "__main__":
    root = jax.random.PRNGKey(0)
    T = 8

    def build_case(key, N, E, F, Fe):
        ks = jax.random.split(key, 14)
        node_features = jax.random.normal(ks[0], (N, F), jnp.float32)
        edge_features = jax.random.normal(ks[1], (E, Fe), jnp.float32)
        edge_index = jnp.stack([
            jax.random.randint(ks[2], (E,), 0, N),
            jax.random.randint(ks[3], (E,), 0, N)]).astype(jnp.int32)

        def unif(k_, shape, fan_in):
            s = 1.0 / (fan_in ** 0.5)
            return jax.random.uniform(k_, shape, jnp.float32, -s, s)

        D = F // T
        # Deterministic synthetic parameters (stored pre-transposed: y = x @ W + b).
        params = {
            "w_edge": unif(ks[4], (Fe, F * D), Fe),   # edgetower Linear
            "b_edge": unif(ks[5], (1, F * D), Fe),
            "w_ih": unif(ks[6], (F, 3 * F), F),       # GRUCell weight_ih^T (r|z|n)
            "b_ih": unif(ks[7], (1, 3 * F), F),
            "w_hh": unif(ks[8], (F, 3 * F), F),       # GRUCell weight_hh^T (r|z|n)
            "b_hh": unif(ks[9], (1, 3 * F), F),
            "w_o1": unif(ks[10], (F, F), F),          # output Linear 1
            "b_o1": unif(ks[11], (1, F), F),
            "w_o2": unif(ks[12], (F, F), F),          # output Linear 2
            "b_o2": unif(ks[13], (1, F), F),
        }
        return node_features, edge_features, edge_index, params

    k1, k2 = jax.random.split(root)

    # --- case 1: small graph, single edge tile ---
    nf, ef, ei, prm = build_case(k1, N=16, E=32, F=32, Fe=8)
    ref = reference(nf, ef, ei, prm, n_towers=T, n_update_steps=3)

    out_f32 = jax.block_until_ready(
        message_passing_layer(nf, ef, ei, prm, n_towers=T, n_update_steps=3,
                              use_bf16=False))
    assert out_f32.shape == (16, 32)
    # gather/scatter use hi/lo bf16 splits (~exact); residual diffs come from TPU
    # default matmul precision applied differently to structurally different dots.
    assert jnp.allclose(out_f32, ref, atol=5e-3, rtol=5e-3), \
        float(jnp.max(jnp.abs(out_f32 - ref)))

    out_bf16 = jax.block_until_ready(
        message_passing_layer(nf, ef, ei, prm, n_towers=T, n_update_steps=3,
                              use_bf16=True))
    assert jnp.allclose(out_bf16, ref, atol=1e-1, rtol=1e-1), \
        float(jnp.max(jnp.abs(out_bf16 - ref)))

    # --- case 2: multi-tile edge streaming + edge/node padding (2 tiles of 128) ---
    nf2, ef2, ei2, prm2 = build_case(k2, N=24, E=200, F=32, Fe=8)
    ref2 = reference(nf2, ef2, ei2, prm2, n_towers=T, n_update_steps=3)
    out2 = jax.block_until_ready(
        message_passing_layer(nf2, ef2, ei2, prm2, n_towers=T, n_update_steps=3,
                              tile_e=128, use_bf16=False))
    assert out2.shape == (24, 32)
    assert jnp.allclose(out2, ref2, atol=1e-2, rtol=1e-2), \
        float(jnp.max(jnp.abs(out2 - ref2)))

    print("KERNEL_OK")
</pallas_src>

<mosaic_0001>
module attributes {stable_mosaic.version = 11 : i64} {
  func.func @kernel(%arg0: i32, %arg1: i32, %arg2: memref<32x1xi32, #tpu.memory_space<vmem>>, %arg3: memref<1x32xi32, #tpu.memory_space<vmem>>, %arg4: memref<16x32xf32, #tpu.memory_space<vmem>>, %arg5: memref<32x8xf32, #tpu.memory_space<vmem>>, %arg6: memref<8x128xf32, #tpu.memory_space<vmem>>, %arg7: memref<1x128xf32, #tpu.memory_space<vmem>>, %arg8: memref<128x32xf32, #tpu.memory_space<vmem>>, %arg9: memref<64x128xf32, #tpu.memory_space<vmem>>, %arg10: memref<1x128xf32, #tpu.memory_space<vmem>>, %arg11: memref<32x32xf32, #tpu.memory_space<vmem>>, %arg12: memref<1x32xf32, #tpu.memory_space<vmem>>, %arg13: memref<32x32xf32, #tpu.memory_space<vmem>>, %arg14: memref<1x32xf32, #tpu.memory_space<vmem>>, %arg15: memref<16x32xf32, #tpu.memory_space<vmem>>, %arg16: memref<16x32xf32, #tpu.memory_space<vmem>>, %arg17: memref<16x32xf32, #tpu.memory_space<vmem>>, %arg18: memref<1x32x128xf32, #tpu.memory_space<vmem>>) attributes {dimension_semantics = [#tpu.dimension_semantics<arbitrary>, #tpu.dimension_semantics<arbitrary>], iteration_bounds = array<i64: 3, 1>, scalar_prefetch = 0 : i64, scratch_operands = 3 : i64, tpu.core_type = #tpu.core_type<tc>, window_params = [{transform_indices = @transform_0, window_bounds = array<i64: 32, 1>}, {transform_indices = @transform_1, window_bounds = array<i64: 1, 32>}, {pipeline_mode = #tpu.pipeline_mode<synchronous>, transform_indices = @transform_2, window_bounds = array<i64: 16, 32>}, {transform_indices = @transform_3, window_bounds = array<i64: 32, 8>}, {pipeline_mode = #tpu.pipeline_mode<synchronous>, transform_indices = @transform_4, window_bounds = array<i64: 8, 128>}, {pipeline_mode = #tpu.pipeline_mode<synchronous>, transform_indices = @transform_5, window_bounds = array<i64: 1, 128>}, {pipeline_mode = #tpu.pipeline_mode<synchronous>, transform_indices = @transform_6, window_bounds = array<i64: 128, 32>}, {pipeline_mode = #tpu.pipeline_mode<synchronous>, transform_indices = @transform_7, window_bounds = array<i64: 64, 128>}, {pipeline_mode = #tpu.pipeline_mode<synchronous>, transform_indices = @transform_8, window_bounds = array<i64: 1, 128>}, {pipeline_mode = #tpu.pipeline_mode<synchronous>, transform_indices = @transform_9, window_bounds = array<i64: 32, 32>}, {pipeline_mode = #tpu.pipeline_mode<synchronous>, transform_indices = @transform_10, window_bounds = array<i64: 1, 32>}, {pipeline_mode = #tpu.pipeline_mode<synchronous>, transform_indices = @transform_11, window_bounds = array<i64: 32, 32>}, {pipeline_mode = #tpu.pipeline_mode<synchronous>, transform_indices = @transform_12, window_bounds = array<i64: 1, 32>}, {pipeline_mode = #tpu.pipeline_mode<synchronous>, transform_indices = @transform_13, window_bounds = array<i64: 16, 32>}]} {
    %c0_i32 = arith.constant 0 : i32
    %0 = arith.cmpi eq, %arg0, %c0_i32 : i32
    %c0_i32_0 = arith.constant 0 : i32
    %1 = arith.cmpi eq, %arg1, %c0_i32_0 : i32
    %2 = arith.andi %0, %1 : i1
    %3 = arith.extui %2 : i1 to i32
    %c0_i32_1 = arith.constant 0 : i32
    %4 = arith.cmpi ne, %3, %c0_i32_1 : i32
    scf.if %4 {
      %c0_31 = arith.constant 0 : index
      %c0_32 = arith.constant 0 : index
      %60 = vector.load %arg4[%c0_31, %c0_32] : memref<16x32xf32, #tpu.memory_space<vmem>>, vector<16x32xf32>
      %c0_33 = arith.constant 0 : index
      %c0_34 = arith.constant 0 : index
      %61 = vector.load %arg16[%c0_33, %c0_34] : memref<16x32xf32, #tpu.memory_space<vmem>>, vector<16x32xf32>
      tpu.vector_store %arg16[%c0_33, %c0_34], %60 {strides = array<i32>} : memref<16x32xf32, #tpu.memory_space<vmem>>, vector<16x32xf32>,
    } else {
    }
    %c0_i32_2 = arith.constant 0 : i32
    %5 = arith.cmpi eq, %arg1, %c0_i32_2 : i32
    %6 = arith.extui %5 : i1 to i32
    %c0_i32_3 = arith.constant 0 : i32
    %7 = arith.cmpi ne, %6, %c0_i32_3 : i32
    scf.if %7 {
      %cst_31 = arith.constant 0.000000e+00 : f32
      %60 = vector.broadcast %cst_31 : f32 to vector<16x32xf32>
      %c0_32 = arith.constant 0 : index
      %c0_33 = arith.constant 0 : index
      %61 = vector.load %arg17[%c0_32, %c0_33] : memref<16x32xf32, #tpu.memory_space<vmem>>, vector<16x32xf32>
      tpu.vector_store %arg17[%c0_32, %c0_33], %60 {strides = array<i32>} : memref<16x32xf32, #tpu.memory_space<vmem>>, vector<16x32xf32>,
    } else {
    }
    %c0_i32_4 = arith.constant 0 : i32
    %8 = arith.cmpi eq, %arg0, %c0_i32_4 : i32
    %9 = arith.extui %8 : i1 to i32
    %c0_i32_5 = arith.constant 0 : i32
    %10 = arith.cmpi ne, %9, %c0_i32_5 : i32
    scf.if %10 {
      %c0_31 = arith.constant 0 : index
      %c0_32 = arith.constant 0 : index
      %60 = vector.load %arg5[%c0_31, %c0_32] : memref<32x8xf32, #tpu.memory_space<vmem>>, vector<32x8xf32>
      %c0_33 = arith.constant 0 : index
      %c0_34 = arith.constant 0 : index
      %61 = vector.load %arg6[%c0_33, %c0_34] : memref<8x128xf32, #tpu.memory_space<vmem>>, vector<8x128xf32>
      %cst_35 = arith.constant dense<0.000000e+00> : vector<32x128xf32>
      %62 = tpu.matmul %60, %61, %cst_35 {dimension_numbers = #tpu.dot_dimension_numbers<[1], [0], [0], [1], [0, 0, 1, 1], [], []>} : vector<32x8xf32>, vector<8x128xf32>, vector<32x128xf32> -> vector<32x128xf32>
      %c0_36 = arith.constant 0 : index
      %c0_37 = arith.constant 0 : index
      %63 = vector.load %arg7[%c0_36, %c0_37] : memref<1x128xf32, #tpu.memory_space<vmem>>, vector<1x128xf32>
      %64 = vector.broadcast %63 : vector<1x128xf32> to vector<32x128xf32>
      %65 = arith.addf %62, %64 : vector<32x128xf32>
      %cst_38 = arith.constant 0.000000e+00 : f32
      %66 = vector.broadcast %cst_38 : f32 to vector<32x128xf32>
      %67 = arith.maximumf %65, %66 : vector<32x128xf32>
      %68 = arith.index_cast %arg1 : i32 to index
      %c0_39 = arith.constant 0 : index
      %c0_40 = arith.constant 0 : index
      %69 = vector.load %arg18[%68, %c0_39, %c0_40] : memref<1x32x128xf32, #tpu.memory_space<vmem>>, vector<1x32x128xf32>
      %70 = vector.shape_cast %69 : vector<1x32x128xf32> to vector<32x128xf32>
      %71 = vector.shape_cast %67 : vector<32x128xf32> to vector<1x32x128xf32>
      tpu.vector_store %arg18[%68, %c0_39, %c0_40], %71 {strides = array<i32>} : memref<1x32x128xf32, #tpu.memory_space<vmem>>, vector<1x32x128xf32>,
    } else {
    }
    %11 = arith.index_cast %arg1 : i32 to index
    %c0 = arith.constant 0 : index
    %c0_6 = arith.constant 0 : index
    %12 = vector.load %arg18[%11, %c0, %c0_6] : memref<1x32x128xf32, #tpu.memory_space<vmem>>, vector<1x32x128xf32>
    %13 = vector.shape_cast %12 : vector<1x32x128xf32> to vector<32x128xf32>
    %14 = tpu.iota {dimensions = array<i32: 1>} : vector<32x16xi32>
    %c0_7 = arith.constant 0 : index
    %c0_8 = arith.constant 0 : index
    %15 = vector.load %arg2[%c0_7, %c0_8] : memref<32x1xi32, #tpu.memory_space<vmem>>, vector<32x1xi32>
    %16 = vector.broadcast %15 : vector<32x1xi32> to vector<32x16xi32>
    %17 = arith.cmpi eq, %14, %16 : vector<32x16xi32>
    %cst = arith.constant 1.000000e+00 : f32
    %cst_9 = arith.constant 0.000000e+00 : f32
    %18 = vector.broadcast %cst : f32 to vector<32x16xf32>
    %19 = vector.broadcast %cst_9 : f32 to vector<32x16xf32>
    %20 = arith.select %17, %18, %19 : vector<32x16xi1>, vector<32x16xf32>
    %21 = arith.truncf %20 : vector<32x16xf32> to vector<32x16xbf16>
    %c0_10 = arith.constant 0 : index
    %c0_11 = arith.constant 0 : index
    %22 = vector.load %arg16[%c0_10, %c0_11] : memref<16x32xf32, #tpu.memory_space<vmem>>, vector<16x32xf32>
    %23 = arith.truncf %22 : vector<16x32xf32> to vector<16x32xbf16>
    %24 = arith.extf %23 : vector<16x32xbf16> to vector<16x32xf32>
    %25 = arith.subf %22, %24 : vector<16x32xf32>
    %26 = arith.truncf %25 : vector<16x32xf32> to vector<16x32xbf16>
    %cst_12 = arith.constant dense<0.000000e+00> : vector<32x32xf32>
    %27 = tpu.matmul %21, %23, %cst_12 {dimension_numbers = #tpu.dot_dimension_numbers<[1], [0], [0], [1], [0, 0, 1, 1], [], []>} : vector<32x16xbf16>, vector<16x32xbf16>, vector<32x32xf32> -> vector<32x32xf32>
    %cst_13 = arith.constant dense<0.000000e+00> : vector<32x32xf32>
    %28 = tpu.matmul %21, %26, %cst_13 {dimension_numbers = #tpu.dot_dimension_numbers<[1], [0], [0], [1], [0, 0, 1, 1], [], []>} : vector<32x16xbf16>, vector<16x32xbf16>, vector<32x32xf32> -> vector<32x32xf32>
    %29 = arith.addf %27, %28 : vector<32x32xf32>
    %30 = tpu.concatenate %29, %29, %29, %29 in 1 : vector<32x32xf32>, vector<32x32xf32>, vector<32x32xf32>, vector<32x32xf32> -> vector<32x128xf32>
    %31 = arith.mulf %13, %30 : vector<32x128xf32>
    %c0_14 = arith.constant 0 : index
    %c0_15 = arith.constant 0 : index
    %32 = vector.load %arg8[%c0_14, %c0_15] : memref<128x32xf32, #tpu.memory_space<vmem>>, vector<128x32xf32>
    %cst_16 = arith.constant dense<0.000000e+00> : vector<32x32xf32>
    %33 = tpu.matmul %31, %32, %cst_16 {dimension_numbers = #tpu.dot_dimension_numbers<[1], [0], [0], [1], [0, 0, 1, 1], [], []>} : vector<32x128xf32>, vector<128x32xf32>, vector<32x32xf32> -> vector<32x32xf32>
    %34 = tpu.iota {dimensions = array<i32: 0>} : vector<16x32xi32>
    %c0_17 = arith.constant 0 : index
    %c0_18 = arith.constant 0 : index
    %35 = vector.load %arg3[%c0_17, %c0_18] : memref<1x32xi32, #tpu.memory_space<vmem>>, vector<1x32xi32>
    %36 = vector.broadcast %35 : vector<1x32xi32> to vector<16x32xi32>
    %37 = arith.cmpi eq, %34, %36 : vector<16x32xi32>
    %cst_19 = arith.constant 1.000000e+00 : f32
    %cst_20 = arith.constant 0.000000e+00 : f32
    %38 = vector.broadcast %cst_19 : f32 to vector<16x32xf32>
    %39 = vector.broadcast %cst_20 : f32 to vector<16x32xf32>
    %40 = arith.select %37, %38, %39 : vector<16x32xi1>, vector<16x32xf32>
    %41 = arith.truncf %40 : vector<16x32xf32> to vector<16x32xbf16>
    %c0_21 = arith.constant 0 : index
    %c0_22 = arith.constant 0 : index
    %42 = vector.load %arg17[%c0_21, %c0_22] : memref<16x32xf32, #tpu.memory_space<vmem>>, vector<16x32xf32>
    %43 = arith.truncf %33 : vector<32x32xf32> to vector<32x32xbf16>
    %44 = arith.extf %43 : vector<32x32xbf16> to vector<32x32xf32>
    %45 = arith.subf %33, %44 : vector<32x32xf32>
    %46 = arith.truncf %45 : vector<32x32xf32> to vector<32x32xbf16>
    %cst_23 = arith.constant dense<0.000000e+00> : vector<16x32xf32>
    %47 = tpu.matmul %41, %43, %cst_23 {dimension_numbers = #tpu.dot_dimension_numbers<[1], [0], [0], [1], [0, 0, 1, 1], [], []>} : vector<16x32xbf16>, vector<32x32xbf16>, vector<16x32xf32> -> vector<16x32xf32>
    %cst_24 = arith.constant dense<0.000000e+00> : vector<16x32xf32>
    %48 = tpu.matmul %41, %46, %cst_24 {dimension_numbers = #tpu.dot_dimension_numbers<[1], [0], [0], [1], [0, 0, 1, 1], [], []>} : vector<16x32xbf16>, vector<32x32xbf16>, vector<16x32xf32> -> vector<16x32xf32>
    %49 = arith.addf %47, %48 : vector<16x32xf32>
    %50 = arith.addf %42, %49 : vector<16x32xf32>
    %c0_25 = arith.constant 0 : index
    %c0_26 = arith.constant 0 : index
    %51 = vector.load %arg17[%c0_25, %c0_26] : memref<16x32xf32, #tpu.memory_space<vmem>>, vector<16x32xf32>
    tpu.vector_store %arg17[%c0_25, %c0_26], %50 {strides = array<i32>} : memref<16x32xf32, #tpu.memory_space<vmem>>, vector<16x32xf32>,
    %c0_i32_27 = arith.constant 0 : i32
    %52 = arith.cmpi eq, %arg1, %c0_i32_27 : i32
    %53 = arith.extui %52 : i1 to i32
    %c0_i32_28 = arith.constant 0 : i32
    %54 = arith.cmpi ne, %53, %c0_i32_28 : i32
    scf.if %54 {
      %c0_31 = arith.constant 0 : index
      %c0_32 = arith.constant 0 : index
      %60 = vector.load %arg16[%c0_31, %c0_32] : memref<16x32xf32, #tpu.memory_space<vmem>>, vector<16x32xf32>
      %c0_33 = arith.constant 0 : index
      %c0_34 = arith.constant 0 : index
      %61 = vector.load %arg17[%c0_33, %c0_34] : memref<16x32xf32, #tpu.memory_space<vmem>>, vector<16x32xf32>
      %62 = tpu.concatenate %61, %60 in 1 : vector<16x32xf32>, vector<16x32xf32> -> vector<16x64xf32>
      %c0_35 = arith.constant 0 : index
      %c0_36 = arith.constant 0 : index
      %63 = vector.load %arg9[%c0_35, %c0_36] : memref<64x128xf32, #tpu.memory_space<vmem>>, vector<64x128xf32>
      %cst_37 = arith.constant dense<0.000000e+00> : vector<16x128xf32>
      %64 = tpu.matmul %62, %63, %cst_37 {dimension_numbers = #tpu.dot_dimension_numbers<[1], [0], [0], [1], [0, 0, 1, 1], [], []>} : vector<16x64xf32>, vector<64x128xf32>, vector<16x128xf32> -> vector<16x128xf32>
      %c0_38 = arith.constant 0 : index
      %c0_39 = arith.constant 0 : index
      %65 = vector.load %arg10[%c0_38, %c0_39] : memref<1x128xf32, #tpu.memory_space<vmem>>, vector<1x128xf32>
      %66 = vector.broadcast %65 : vector<1x128xf32> to vector<16x128xf32>
      %67 = arith.addf %64, %66 : vector<16x128xf32>
      %68 = vector.extract_strided_slice %67 {offsets = [0, 0], sizes = [16, 32], strides = [1, 1]} : vector<16x128xf32> to vector<16x32xf32>
      %69 = arith.negf %68 : vector<16x32xf32>
      %70 = math.exp %69 : vector<16x32xf32>
      %cst_40 = arith.constant 1.000000e+00 : f32
      %71 = vector.broadcast %cst_40 : f32 to vector<16x32xf32>
      %72 = arith.addf %71, %70 : vector<16x32xf32>
      %73 = arith.divf %71, %72 : vector<16x32xf32>
      %74 = vector.extract_strided_slice %67 {offsets = [0, 32], sizes = [16, 32], strides = [1, 1]} : vector<16x128xf32> to vector<16x32xf32>
      %75 = arith.negf %74 : vector<16x32xf32>
      %76 = math.exp %75 : vector<16x32xf32>
      %cst_41 = arith.constant 1.000000e+00 : f32
      %77 = vector.broadcast %cst_41 : f32 to vector<16x32xf32>
      %78 = arith.addf %77, %76 : vector<16x32xf32>
      %79 = arith.divf %77, %78 : vector<16x32xf32>
      %80 = vector.extract_strided_slice %67 {offsets = [0, 64], sizes = [16, 32], strides = [1, 1]} : vector<16x128xf32> to vector<16x32xf32>
      %81 = vector.extract_strided_slice %67 {offsets = [0, 96], sizes = [16, 32], strides = [1, 1]} : vector<16x128xf32> to vector<16x32xf32>
      %82 = arith.mulf %73, %81 : vector<16x32xf32>
      %83 = arith.addf %80, %82 : vector<16x32xf32>
      %84 = math.tanh %83 : vector<16x32xf32>
      %cst_42 = arith.constant 1.000000e+00 : f32
      %85 = vector.broadcast %cst_42 : f32 to vector<16x32xf32>
      %86 = arith.subf %85, %79 : vector<16x32xf32>
      %87 = arith.mulf %86, %84 : vector<16x32xf32>
      %88 = arith.mulf %79, %60 : vector<16x32xf32>
      %89 = arith.addf %87, %88 : vector<16x32xf32>
      %c0_43 = arith.constant 0 : index
      %c0_44 = arith.constant 0 : index
      %90 = vector.load %arg16[%c0_43, %c0_44] : memref<16x32xf32, #tpu.memory_space<vmem>>, vector<16x32xf32>
      tpu.vector_store %arg16[%c0_43, %c0_44], %89 {strides = array<i32>} : memref<16x32xf32, #tpu.memory_space<vmem>>, vector<16x32xf32>,
    } else {
    }
    %c2_i32 = arith.constant 2 : i32
    %55 = arith.cmpi eq, %arg0, %c2_i32 : i32
    %c0_i32_29 = arith.constant 0 : i32
    %56 = arith.cmpi eq, %arg1, %c0_i32_29 : i32
    %57 = arith.andi %55, %56 : i1
    %58 = arith.extui %57 : i1 to i32
    %c0_i32_30 = arith.constant 0 : i32
    %59 = arith.cmpi ne, %58, %c0_i32_30 : i32
    scf.if %59 {
      %c0_31 = arith.constant 0 : index
      %c0_32 = arith.constant 0 : index
      %60 = vector.load %arg16[%c0_31, %c0_32] : memref<16x32xf32, #tpu.memory_space<vmem>>, vector<16x32xf32>
      %c0_33 = arith.constant 0 : index
      %c0_34 = arith.constant 0 : index
      %61 = vector.load %arg11[%c0_33, %c0_34] : memref<32x32xf32, #tpu.memory_space<vmem>>, vector<32x32xf32>
      %cst_35 = arith.constant dense<0.000000e+00> : vector<16x32xf32>
      %62 = tpu.matmul %60, %61, %cst_35 {dimension_numbers = #tpu.dot_dimension_numbers<[1], [0], [0], [1], [0, 0, 1, 1], [], []>} : vector<16x32xf32>, vector<32x32xf32>, vector<16x32xf32> -> vector<16x32xf32>
      %c0_36 = arith.constant 0 : index
      %c0_37 = arith.constant 0 : index
      %63 = vector.load %arg12[%c0_36, %c0_37] : memref<1x32xf32, #tpu.memory_space<vmem>>, vector<1x32xf32>
      %64 = vector.broadcast %63 : vector<1x32xf32> to vector<16x32xf32>
      %65 = arith.addf %62, %64 : vector<16x32xf32>
      %cst_38 = arith.constant 0.000000e+00 : f32
      %66 = vector.broadcast %cst_38 : f32 to vector<16x32xf32>
      %67 = arith.maximumf %65, %66 : vector<16x32xf32>
      %c0_39 = arith.constant 0 : index
      %c0_40 = arith.constant 0 : index
      %68 = vector.load %arg13[%c0_39, %c0_40] : memref<32x32xf32, #tpu.memory_space<vmem>>, vector<32x32xf32>
      %cst_41 = arith.constant dense<0.000000e+00> : vector<16x32xf32>
      %69 = tpu.matmul %67, %68, %cst_41 {dimension_numbers = #tpu.dot_dimension_numbers<[1], [0], [0], [1], [0, 0, 1, 1], [], []>} : vector<16x32xf32>, vector<32x32xf32>, vector<16x32xf32> -> vector<16x32xf32>
      %c0_42 = arith.constant 0 : index
      %c0_43 = arith.constant 0 : index
      %70 = vector.load %arg14[%c0_42, %c0_43] : memref<1x32xf32, #tpu.memory_space<vmem>>, vector<1x32xf32>
      %71 = vector.broadcast %70 : vector<1x32xf32> to vector<16x32xf32>
      %72 = arith.addf %69, %71 : vector<16x32xf32>
      %c0_44 = arith.constant 0 : index
      %c0_45 = arith.constant 0 : index
      %73 = vector.load %arg15[%c0_44, %c0_45] : memref<16x32xf32, #tpu.memory_space<vmem>>, vector<16x32xf32>
      tpu.vector_store %arg15[%c0_44, %c0_45], %72 {strides = array<i32>} : memref<16x32xf32, #tpu.memory_space<vmem>>, vector<16x32xf32>,
    } else {
    }
    return
  }
  func.func @transform_0(%arg0: i32, %arg1: i32) -> (i32, i32) {
    %c0_i32 = arith.constant 0 : i32
    %c0_i32_0 = arith.constant 0 : i32
    return %arg1, %c0_i32 : i32, i32
  }
  func.func @transform_1(%arg0: i32, %arg1: i32) -> (i32, i32) {
    %c0_i32 = arith.constant 0 : i32
    %c0_i32_0 = arith.constant 0 : i32
    return %c0_i32, %arg1 : i32, i32
  }
  func.func @transform_2(%arg0: i32, %arg1: i32) -> (i32, i32) {
    %c0_i32 = arith.constant 0 : i32
    %c0_i32_0 = arith.constant 0 : i32
    %c0_i32_1 = arith.constant 0 : i32
    return %c0_i32, %c0_i32_0 : i32, i32
  }
  func.func @transform_3(%arg0: i32, %arg1: i32) -> (i32, i32) {
    %c0_i32 = arith.constant 0 : i32
    %c0_i32_0 = arith.constant 0 : i32
    return %arg1, %c0_i32 : i32, i32
  }
  func.func @transform_4(%arg0: i32, %arg1: i32) -> (i32, i32) {
    %c0_i32 = arith.constant 0 : i32
    %c0_i32_0 = arith.constant 0 : i32
    %c0_i32_1 = arith.constant 0 : i32
    return %c0_i32, %c0_i32_0 : i32, i32
  }
  func.func @transform_5(%arg0: i32, %arg1: i32) -> (i32, i32) {
    %c0_i32 = arith.constant 0 : i32
    %c0_i32_0 = arith.constant 0 : i32
    %c0_i32_1 = arith.constant 0 : i32
    return %c0_i32, %c0_i32_0 : i32, i32
  }
  func.func @transform_6(%arg0: i32, %arg1: i32) -> (i32, i32) {
    %c0_i32 = arith.constant 0 : i32
    %c0_i32_0 = arith.constant 0 : i32
    %c0_i32_1 = arith.constant 0 : i32
    return %c0_i32, %c0_i32_0 : i32, i32
  }
  func.func @transform_7(%arg0: i32, %arg1: i32) -> (i32, i32) {
    %c0_i32 = arith.constant 0 : i32
    %c0_i32_0 = arith.constant 0 : i32
    %c0_i32_1 = arith.constant 0 : i32
    return %c0_i32, %c0_i32_0 : i32, i32
  }
  func.func @transform_8(%arg0: i32, %arg1: i32) -> (i32, i32) {
    %c0_i32 = arith.constant 0 : i32
    %c0_i32_0 = arith.constant 0 : i32
    %c0_i32_1 = arith.constant 0 : i32
    return %c0_i32, %c0_i32_0 : i32, i32
  }
  func.func @transform_9(%arg0: i32, %arg1: i32) -> (i32, i32) {
    %c0_i32 = arith.constant 0 : i32
    %c0_i32_0 = arith.constant 0 : i32
    %c0_i32_1 = arith.constant 0 : i32
    return %c0_i32, %c0_i32_0 : i32, i32
  }
  func.func @transform_10(%arg0: i32, %arg1: i32) -> (i32, i32) {
    %c0_i32 = arith.constant 0 : i32
    %c0_i32_0 = arith.constant 0 : i32
    %c0_i32_1 = arith.constant 0 : i32
    return %c0_i32, %c0_i32_0 : i32, i32
  }
  func.func @transform_11(%arg0: i32, %arg1: i32) -> (i32, i32) {
    %c0_i32 = arith.constant 0 : i32
    %c0_i32_0 = arith.constant 0 : i32
    %c0_i32_1 = arith.constant 0 : i32
    return %c0_i32, %c0_i32_0 : i32, i32
  }
  func.func @transform_12(%arg0: i32, %arg1: i32) -> (i32, i32) {
    %c0_i32 = arith.constant 0 : i32
    %c0_i32_0 = arith.constant 0 : i32
    %c0_i32_1 = arith.constant 0 : i32
    return %c0_i32, %c0_i32_0 : i32, i32
  }
  func.func @transform_13(%arg0: i32, %arg1: i32) -> (i32, i32) {
    %c0_i32 = arith.constant 0 : i32
    %c0_i32_0 = arith.constant 0 : i32
    %c0_i32_1 = arith.constant 0 : i32
    return %c0_i32, %c0_i32_0 : i32, i32
  }
}

</mosaic_0001>

<llo_original>
// kernel: tpu_custom_call.1
$region0: #{tpu_custom_call.1}
  #allocation0 [shape = 'u32[]', space=smem, size = 0x4, offset = 0x4, fixed_abs, tag = 'smem constant byte address 0x4 - core index']
  #allocation1 [shape = 'u32[144,128]{1,0:T(1,128)}', space=vmem, size = 0x12000, scoped, tag = 'internal scratch']
  #allocation2 [shape = 'f32[16,32]{1,0:T(8,128)}', space=vmem, size = 0x2000, scoped, tag = 'scratch operand']
  #allocation3 [shape = 'f32[16,32]{1,0:T(8,128)}', space=vmem, size = 0x2000, scoped, tag = 'scratch operand']
  #allocation4 [shape = 'f32[1,32,128]{2,1,0:T(8,128)}', space=vmem, size = 0x4000, scoped, tag = 'scratch operand']
  %s0 = inlined_call_operand.vmem [shape: s32[32,1], index: 0, kind: input, shape index: {}]
  %s1 = inlined_call_operand.vmem [shape: s32[1,32], index: 1, kind: input, shape index: {}]
  %s2 = inlined_call_operand.vmem [shape: f32[16,32], index: 2, kind: input, shape index: {}]
  %s3 = inlined_call_operand.vmem [shape: f32[32,8], index: 3, kind: input, shape index: {}]
  %s4 = inlined_call_operand.vmem [shape: f32[8,128], index: 4, kind: input, shape index: {}]
  %s5 = inlined_call_operand.vmem [shape: f32[1,128], index: 5, kind: input, shape index: {}]
  %s6 = inlined_call_operand.vmem [shape: f32[128,32], index: 6, kind: input, shape index: {}]
  %s7 = inlined_call_operand.vmem [shape: f32[64,128], index: 7, kind: input, shape index: {}]
  %s8 = inlined_call_operand.vmem [shape: f32[1,128], index: 8, kind: input, shape index: {}]
  %s9 = inlined_call_operand.vmem [shape: f32[32,32], index: 9, kind: input, shape index: {}]
  %s10 = inlined_call_operand.vmem [shape: f32[1,32], index: 10, kind: input, shape index: {}]
  %s11 = inlined_call_operand.vmem [shape: f32[32,32], index: 11, kind: input, shape index: {}]
  %s12 = inlined_call_operand.vmem [shape: f32[1,32], index: 12, kind: input, shape index: {}]
  %s13 = inlined_call_operand.hbm [shape: f32[16,32], index: 13, kind: output, shape index: {}]
  %s14 = sld [smem:[#allocation0]]
  $region105: #{tpu_custom_call.1} parent=0
    _
  %s16 = ssub.s32 1, %s14
  %s17 = scalar_select 0, %s16, %s14
  $region1: #{tpu_custom_call.1} parent=0
    #allocation5 [shape = 'u8[8192]{0}', space=vmem, size = 0x2000, scoped, tag = 'output window, operand 0, single buffered']
    #allocation6 [shape = 's32[2]{0}', space=sflag, size = 0x8, scoped, tag = 'scoped memory for tpu_custom_call.1']
    %18 = vsyncpa [#allocation6], 0
    loop: start=0, step=1, limit=5
    $region2: #{tpu_custom_call.1} parent=1 // loop_pre_header
      _
    $region3: #{tpu_custom_call.1} parent=1 // loop_header
      %s20 = sphi 0, %s24
      %p21 = scmp.ge.s32.totalorder %s20, 5
      %s27 = sphi 0, %s39
      %s28 = sphi 0, %s35
      %s29 = sphi 0, %s27
      %s30 = sphi 0, %s28
      %s31 = sphi 0, %s29
      %s32 = sphi 0, %s30
      %s42 = sphi 0, %s44
      %s45 = sphi 0, %s42
      %s46 = sphi 0, %s45
      %s62 = sphi 0, %s46
      %s68 = sphi 0, %s70
      %s71 = sphi 0, %s68
      %s72 = sphi 0, %s71
      %s88 = sphi 0, %s72
      %s92 = sphi 0, %s92
      %s94 = sphi 0, %s92
      %s95 = sphi 0, %s94
      %s109 = sphi 0, %s95
      %s115 = sphi 0, %s117
      %s118 = sphi 0, %s115
      %s119 = sphi 0, %s118
      %s135 = sphi 0, %s119
      %s139 = sphi 0, %s139
      %s141 = sphi 0, %s139
      %s142 = sphi 0, %s141
      %s156 = sphi 0, %s142
      %s160 = sphi 0, %s160
      %s162 = sphi 0, %s160
      %s163 = sphi 0, %s162
      %s177 = sphi 0, %s163
      %s181 = sphi 0, %s181
      %s183 = sphi 0, %s181
      %s184 = sphi 0, %s183
      %s198 = sphi 0, %s184
      %s202 = sphi 0, %s202
      %s204 = sphi 0, %s202
      %s205 = sphi 0, %s204
      %s219 = sphi 0, %s205
      %s223 = sphi 0, %s223
      %s225 = sphi 0, %s223
      %s226 = sphi 0, %s225
      %s240 = sphi 0, %s226
      %s244 = sphi 0, %s244
      %s246 = sphi 0, %s244
      %s247 = sphi 0, %s246
      %s261 = sphi 0, %s247
      %s265 = sphi 0, %s265
      %s267 = sphi 0, %s265
      %s268 = sphi 0, %s267
      %s282 = sphi 0, %s268
      %s286 = sphi 0, %s286
      %s288 = sphi 0, %s286
      %s289 = sphi 0, %s288
      %s303 = sphi 0, %s289
      %s307 = sphi 0, %s307
      %s309 = sphi 0, %s307
      %s310 = sphi 0, %s309
      %s324 = sphi 0, %s310
      %s328 = sphi 0, %s328
      %s330 = sphi 0, %s328
      %s331 = sphi 0, %s330
      %s345 = sphi 0, %s331
    $region4: #{tpu_custom_call.1} parent=1 // loop_header_branch
      %23 = sbr.rel (%p21) target = $region8
    $region5: #{tpu_custom_call.1} parent=1 // loop_body
      %s25 = ssub.s32 %s20, 1
      %s26 = ssub.s32 %s20, 2
      %s33 = sadd.s32 1, %s28
      %p34 = scmp.ge.s32.totalorder %s33, 1
      %s35 = scalar_select %p34, 0, %s33
      %s36 = sadd.s32 1, %s27
      %s37 = scalar_select %p34, %s36, %s27
      %p38 = scmp.ge.s32.totalorder %s37, 3
      %s39 = scalar_select %p38, 0, %s37
      %s40 = ssub.s32 %s28, %s35
      %p41 = scmp.eq.s32.totalorder %s40, 0
      %s43 = sadd.s32 %s42, 1
      %s44 = scalar_select %p41, %s42, %s43
      %p47 = pneg %p41
      %p48 = scmp.eq.s32.totalorder %s20, 2
      %p49 = por %p47, %p48
      %p50 = scmp.ne.s32.totalorder %s42, %s45
      %p51 = scmp.eq.s32.totalorder %s20, 0
      %p52 = por %p50, %p51
      %p53 = scmp.ne.s32.totalorder %s42, %s45
      %p54 = scmp.eq.s32.totalorder %s25, 2
      %p55 = por %p53, %p54
      %p56 = scmp.ne.s32.totalorder %s45, %s46
      %p57 = scmp.eq.s32.totalorder %s25, 0
      %p58 = por %p56, %p57
      %p59 = scmp.ne.s32.totalorder %s45, %s46
      %p60 = scmp.eq.s32.totalorder %s26, 2
      %p61 = por %p59, %p60
      %p63 = scmp.ne.s32.totalorder %s46, %s62
      %p64 = scmp.eq.s32.totalorder %s26, 0
      %p65 = por %p63, %p64
      %s66 = ssub.s32 %s28, %s35
      %p67 = scmp.eq.s32.totalorder %s66, 0
      %s69 = sadd.s32 %s68, 1
      %s70 = scalar_select %p67, %s68, %s69
      %p73 = pneg %p67
      %p74 = scmp.eq.s32.totalorder %s20, 2
      %p75 = por %p73, %p74
      %p76 = scmp.ne.s32.totalorder %s68, %s71
      %p77 = scmp.eq.s32.totalorder %s20, 0
      %p78 = por %p76, %p77
      %p79 = scmp.ne.s32.totalorder %s68, %s71
      %p80 = scmp.eq.s32.totalorder %s25, 2
      %p81 = por %p79, %p80
      %p82 = scmp.ne.s32.totalorder %s71, %s72
      %p83 = scmp.eq.s32.totalorder %s25, 0
      %p84 = por %p82, %p83
      %p85 = scmp.ne.s32.totalorder %s71, %s72
      %p86 = scmp.eq.s32.totalorder %s26, 2
      %p87 = por %p85, %p86
      %p89 = scmp.ne.s32.totalorder %s72, %s88
      %p90 = scmp.eq.s32.totalorder %s26, 0
      %p91 = por %p89, %p90
      %s93 = sadd.s32 %s92, 1
      %p96 = scmp.eq.s32.totalorder %s20, 2
      %p97 = scmp.ne.s32.totalorder %s92, %s94
      %p98 = scmp.eq.s32.totalorder %s20, 0
      %p99 = por %p97, %p98
      %p100 = scmp.ne.s32.totalorder %s92, %s94
      %p101 = scmp.eq.s32.totalorder %s25, 2
      %p102 = por %p100, %p101
      %p103 = scmp.ne.s32.totalorder %s94, %s95
      %p104 = scmp.eq.s32.totalorder %s25, 0
      %p105 = por %p103, %p104
      %p106 = scmp.ne.s32.totalorder %s94, %s95
      %p107 = scmp.eq.s32.totalorder %s26, 2
      %p108 = por %p106, %p107
      %p110 = scmp.ne.s32.totalorder %s95, %s109
      %p111 = scmp.eq.s32.totalorder %s26, 0
      %p112 = por %p110, %p111
      %s113 = ssub.s32 %s28, %s35
      %p114 = scmp.eq.s32.totalorder %s113, 0
      %s116 = sadd.s32 %s115, 1
      %s117 = scalar_select %p114, %s115, %s116
      %p120 = pneg %p114
      %p121 = scmp.eq.s32.totalorder %s20, 2
      %p122 = por %p120, %p121
      %p123 = scmp.ne.s32.totalorder %s115, %s118
      %p124 = scmp.eq.s32.totalorder %s20, 0
      %p125 = por %p123, %p124
      %p126 = scmp.ne.s32.totalorder %s115, %s118
      %p127 = scmp.eq.s32.totalorder %s25, 2
      %p128 = por %p126, %p127
      %p129 = scmp.ne.s32.totalorder %s118, %s119
      %p130 = scmp.eq.s32.totalorder %s25, 0
      %p131 = por %p129, %p130
      %p132 = scmp.ne.s32.totalorder %s118, %s119
      %p133 = scmp.eq.s32.totalorder %s26, 2
      %p134 = por %p132, %p133
      %p136 = scmp.ne.s32.totalorder %s119, %s135
      %p137 = scmp.eq.s32.totalorder %s26, 0
      %p138 = por %p136, %p137
      %s140 = sadd.s32 %s139, 1
      %p143 = scmp.eq.s32.totalorder %s20, 2
      %p144 = scmp.ne.s32.totalorder %s139, %s141
      %p145 = scmp.eq.s32.totalorder %s20, 0
      %p146 = por %p144, %p145
      %p147 = scmp.ne.s32.totalorder %s139, %s141
      %p148 = scmp.eq.s32.totalorder %s25, 2
      %p149 = por %p147, %p148
      %p150 = scmp.ne.s32.totalorder %s141, %s142
      %p151 = scmp.eq.s32.totalorder %s25, 0
      %p152 = por %p150, %p151
      %p153 = scmp.ne.s32.totalorder %s141, %s142
      %p154 = scmp.eq.s32.totalorder %s26, 2
      %p155 = por %p153, %p154
      %p157 = scmp.ne.s32.totalorder %s142, %s156
      %p158 = scmp.eq.s32.totalorder %s26, 0
      %p159 = por %p157, %p158
      %s161 = sadd.s32 %s160, 1
      %p164 = scmp.eq.s32.totalorder %s20, 2
      %p165 = scmp.ne.s32.totalorder %s160, %s162
      %p166 = scmp.eq.s32.totalorder %s20, 0
      %p167 = por %p165, %p166
      %p168 = scmp.ne.s32.totalorder %s160, %s162
      %p169 = scmp.eq.s32.totalorder %s25, 2
      %p170 = por %p168, %p169
      %p171 = scmp.ne.s32.totalorder %s162, %s163
      %p172 = scmp.eq.s32.totalorder %s25, 0
      %p173 = por %p171, %p172
      %p174 = scmp.ne.s32.totalorder %s162, %s163
      %p175 = scmp.eq.s32.totalorder %s26, 2
      %p176 = por %p174, %p175
      %p178 = scmp.ne.s32.totalorder %s163, %s177
      %p179 = scmp.eq.s32.totalorder %s26, 0
      %p180 = por %p178, %p179
      %s182 = sadd.s32 %s181, 1
      %p185 = scmp.eq.s32.totalorder %s20, 2
      %p186 = scmp.ne.s32.totalorder %s181, %s183
      %p187 = scmp.eq.s32.totalorder %s20, 0
      %p188 = por %p186, %p187
      %p189 = scmp.ne.s32.totalorder %s181, %s183
      %p190 = scmp.eq.s32.totalorder %s25, 2
      %p191 = por %p189, %p190
      %p192 = scmp.ne.s32.totalorder %s183, %s184
      %p193 = scmp.eq.s32.totalorder %s25, 0
      %p194 = por %p192, %p193
      %p195 = scmp.ne.s32.totalorder %s183, %s184
      %p196 = scmp.eq.s32.totalorder %s26, 2
      %p197 = por %p195, %p196
      %p199 = scmp.ne.s32.totalorder %s184, %s198
      %p200 = scmp.eq.s32.totalorder %s26, 0
      %p201 = por %p199, %p200
      %s203 = sadd.s32 %s202, 1
      %p206 = scmp.eq.s32.totalorder %s20, 2
      %p207 = scmp.ne.s32.totalorder %s202, %s204
      %p208 = scmp.eq.s32.totalorder %s20, 0
      %p209 = por %p207, %p208
      %p210 = scmp.ne.s32.totalorder %s202, %s204
      %p211 = scmp.eq.s32.totalorder %s25, 2
      %p212 = por %p210, %p211
      %p213 = scmp.ne.s32.totalorder %s204, %s205
      %p214 = scmp.eq.s32.totalorder %s25, 0
      %p215 = por %p213, %p214
      %p216 = scmp.ne.s32.totalorder %s204, %s205
      %p217 = scmp.eq.s32.totalorder %s26, 2
      %p218 = por %p216, %p217
      %p220 = scmp.ne.s32.totalorder %s205, %s219
      %p221 = scmp.eq.s32.totalorder %s26, 0
      %p222 = por %p220, %p221
      %s224 = sadd.s32 %s223, 1
      %p227 = scmp.eq.s32.totalorder %s20, 2
      %p228 = scmp.ne.s32.totalorder %s223, %s225
      %p229 = scmp.eq.s32.totalorder %s20, 0
      %p230 = por %p228, %p229
      %p231 = scmp.ne.s32.totalorder %s223, %s225
      %p232 = scmp.eq.s32.totalorder %s25, 2
      %p233 = por %p231, %p232
      %p234 = scmp.ne.s32.totalorder %s225, %s226
      %p235 = scmp.eq.s32.totalorder %s25, 0
      %p236 = por %p234, %p235
      %p237 = scmp.ne.s32.totalorder %s225, %s226
      %p238 = scmp.eq.s32.totalorder %s26, 2
      %p239 = por %p237, %p238
      %p241 = scmp.ne.s32.totalorder %s226, %s240
      %p242 = scmp.eq.s32.totalorder %s26, 0
      %p243 = por %p241, %p242
      %s245 = sadd.s32 %s244, 1
      %p248 = scmp.eq.s32.totalorder %s20, 2
      %p249 = scmp.ne.s32.totalorder %s244, %s246
      %p250 = scmp.eq.s32.totalorder %s20, 0
      %p251 = por %p249, %p250
      %p252 = scmp.ne.s32.totalorder %s244, %s246
      %p253 = scmp.eq.s32.totalorder %s25, 2
      %p254 = por %p252, %p253
      %p255 = scmp.ne.s32.totalorder %s246, %s247
      %p256 = scmp.eq.s32.totalorder %s25, 0
      %p257 = por %p255, %p256
      %p258 = scmp.ne.s32.totalorder %s246, %s247
      %p259 = scmp.eq.s32.totalorder %s26, 2
      %p260 = por %p258, %p259
      %p262 = scmp.ne.s32.totalorder %s247, %s261
      %p263 = scmp.eq.s32.totalorder %s26, 0
      %p264 = por %p262, %p263
      %s266 = sadd.s32 %s265, 1
      %p269 = scmp.eq.s32.totalorder %s20, 2
      %p270 = scmp.ne.s32.totalorder %s265, %s267
      %p271 = scmp.eq.s32.totalorder %s20, 0
      %p272 = por %p270, %p271
      %p273 = scmp.ne.s32.totalorder %s265, %s267
      %p274 = scmp.eq.s32.totalorder %s25, 2
      %p275 = por %p273, %p274
      %p276 = scmp.ne.s32.totalorder %s267, %s268
      %p277 = scmp.eq.s32.totalorder %s25, 0
      %p278 = por %p276, %p277
      %p279 = scmp.ne.s32.totalorder %s267, %s268
      %p280 = scmp.eq.s32.totalorder %s26, 2
      %p281 = por %p279, %p280
      %p283 = scmp.ne.s32.totalorder %s268, %s282
      %p284 = scmp.eq.s32.totalorder %s26, 0
      %p285 = por %p283, %p284
      %s287 = sadd.s32 %s286, 1
      %p290 = scmp.eq.s32.totalorder %s20, 2
      %p291 = scmp.ne.s32.totalorder %s286, %s288
      %p292 = scmp.eq.s32.totalorder %s20, 0
      %p293 = por %p291, %p292
      %p294 = scmp.ne.s32.totalorder %s286, %s288
      %p295 = scmp.eq.s32.totalorder %s25, 2
      %p296 = por %p294, %p295
      %p297 = scmp.ne.s32.totalorder %s288, %s289
      %p298 = scmp.eq.s32.totalorder %s25, 0
      %p299 = por %p297, %p298
      %p300 = scmp.ne.s32.totalorder %s288, %s289
      %p301 = scmp.eq.s32.totalorder %s26, 2
      %p302 = por %p300, %p301
      %p304 = scmp.ne.s32.totalorder %s289, %s303
      %p305 = scmp.eq.s32.totalorder %s26, 0
      %p306 = por %p304, %p305
      %s308 = sadd.s32 %s307, 1
      %p311 = scmp.eq.s32.totalorder %s20, 2
      %p312 = scmp.ne.s32.totalorder %s307, %s309
      %p313 = scmp.eq.s32.totalorder %s20, 0
      %p314 = por %p312, %p313
      %p315 = scmp.ne.s32.totalorder %s307, %s309
      %p316 = scmp.eq.s32.totalorder %s25, 2
      %p317 = por %p315, %p316
      %p318 = scmp.ne.s32.totalorder %s309, %s310
      %p319 = scmp.eq.s32.totalorder %s25, 0
      %p320 = por %p318, %p319
      %p321 = scmp.ne.s32.totalorder %s309, %s310
      %p322 = scmp.eq.s32.totalorder %s26, 2
      %p323 = por %p321, %p322
      %p325 = scmp.ne.s32.totalorder %s310, %s324
      %p326 = scmp.eq.s32.totalorder %s26, 0
      %p327 = por %p325, %p326
      %s329 = sadd.s32 %s328, 1
      %p332 = scmp.eq.s32.totalorder %s20, 2
      %p333 = scmp.ne.s32.totalorder %s328, %s330
      %p334 = scmp.eq.s32.totalorder %s20, 0
      %p335 = por %p333, %p334
      %p336 = scmp.ne.s32.totalorder %s328, %s330
      %p337 = scmp.eq.s32.totalorder %s25, 2
      %p338 = por %p336, %p337
      %p339 = scmp.ne.s32.totalorder %s330, %s331
      %p340 = scmp.eq.s32.totalorder %s25, 0
      %p341 = por %p339, %p340
      %p342 = scmp.ne.s32.totalorder %s330, %s331
      %p343 = scmp.eq.s32.totalorder %s26, 2
      %p344 = por %p342, %p343
      %p346 = scmp.ne.s32.totalorder %s331, %s345
      %p347 = scmp.eq.s32.totalorder %s26, 0
      %p348 = por %p346, %p347
      %p349 = scmp.le.s32.totalorder 1, %s20
      %p350 = scmp.lt.s32.totalorder %s20, 4
      %p351 = pnand %p349, %p350
      %p352 = pneg %p351
      // Predicated region
      $region9: #{tpu_custom_call.1} parent=5 // pred_check
        _
      $region10: #{tpu_custom_call.1} parent=5 // pred_check_branch
        %354 = sbr.rel (%p351) target = $region12
      $region11: #{tpu_custom_call.1} parent=5 // pred_region
        %s355 = ssub.s32 %s20, 1
        // Predicated region
        $region13: #{tpu_custom_call.1} parent=11 // pred_check
          %p356 = pneg %p58
        $region14: #{tpu_custom_call.1} parent=11 // pred_check_branch
          %358 = sbr.rel (%p356) target = $region16
        $region15: #{tpu_custom_call.1} parent=11 // pred_region
          %s359 = smul.u32 4, %s30
          %p360 = scmp.lt.s32.totalorder %s359, 3
          %s361 = scalar_select %p360, %s359, 3
          %s362 = smul.addr %s361, 8
          %s363 = scalar_lea.vmem %s0, %s362
          %s364 = smul.u32 4, %s30
        $region16: #{tpu_custom_call.1} parent=11 // pred_fallthru
          _
        // Predicated region
        $region17: #{tpu_custom_call.1} parent=11 // pred_check
          %p365 = pneg %p84
        $region18: #{tpu_custom_call.1} parent=11 // pred_check_branch
          %367 = sbr.rel (%p365) target = $region20
        $region19: #{tpu_custom_call.1} parent=11 // pred_region
          %p368 = scmp.lt.s32.totalorder %s30, 0
          %s369 = scalar_select %p368, %s30, 0
          %s370 = scalar_lea.vmem %s1, %s369
        $region20: #{tpu_custom_call.1} parent=11 // pred_fallthru
          _
        // Predicated region
        $region21: #{tpu_custom_call.1} parent=11 // pred_check
          %p371 = pneg %p105
        $region22: #{tpu_custom_call.1} parent=11 // pred_check_branch
          %373 = sbr.rel (%p371) target = $region24
        $region23: #{tpu_custom_call.1} parent=11 // pred_region
          _
        $region24: #{tpu_custom_call.1} parent=11 // pred_fallthru
          _
        // Predicated region
        $region25: #{tpu_custom_call.1} parent=11 // pred_check
          %p374 = pneg %p131
        $region26: #{tpu_custom_call.1} parent=11 // pred_check_branch
          %376 = sbr.rel (%p374) target = $region28
        $region27: #{tpu_custom_call.1} parent=11 // pred_region
          %s377 = smul.u32 4, %s30
          %p378 = scmp.lt.s32.totalorder %s377, 3
          %s379 = scalar_select %p378, %s377, 3
          %s380 = smul.addr %s379, 8
          %s381 = scalar_lea.vmem %s3, %s380
          %s382 = smul.u32 4, %s30
        $region28: #{tpu_custom_call.1} parent=11 // pred_fallthru
          _
        // Predicated region
        $region29: #{tpu_custom_call.1} parent=11 // pred_check
          %p383 = pneg %p152
        $region30: #{tpu_custom_call.1} parent=11 // pred_check_branch
          %385 = sbr.rel (%p383) target = $region32
        $region31: #{tpu_custom_call.1} parent=11 // pred_region
          _
        $region32: #{tpu_custom_call.1} parent=11 // pred_fallthru
          _
        // Predicated region
        $region33: #{tpu_custom_call.1} parent=11 // pred_check
          %p386 = pneg %p173
        $region34: #{tpu_custom_call.1} parent=11 // pred_check_branch
          %388 = sbr.rel (%p386) target = $region36
        $region35: #{tpu_custom_call.1} parent=11 // pred_region
          _
        $region36: #{tpu_custom_call.1} parent=11 // pred_fallthru
          _
        // Predicated region
        $region37: #{tpu_custom_call.1} parent=11 // pred_check
          %p389 = pneg %p194
        $region38: #{tpu_custom_call.1} parent=11 // pred_check_branch
          %391 = sbr.rel (%p389) target = $region40
        $region39: #{tpu_custom_call.1} parent=11 // pred_region
          _
        $region40: #{tpu_custom_call.1} parent=11 // pred_fallthru
          _
        // Predicated region
        $region41: #{tpu_custom_call.1} parent=11 // pred_check
          %p392 = pneg %p215
        $region42: #{tpu_custom_call.1} parent=11 // pred_check_branch
          %394 = sbr.rel (%p392) target = $region44
        $region43: #{tpu_custom_call.1} parent=11 // pred_region
          _
        $region44: #{tpu_custom_call.1} parent=11 // pred_fallthru
          _
        // Predicated region
        $region45: #{tpu_custom_call.1} parent=11 // pred_check
          %p395 = pneg %p236
        $region46: #{tpu_custom_call.1} parent=11 // pred_check_branch
          %397 = sbr.rel (%p395) target = $region48
        $region47: #{tpu_custom_call.1} parent=11 // pred_region
          _
        $region48: #{tpu_custom_call.1} parent=11 // pred_fallthru
          _
        // Predicated region
        $region49: #{tpu_custom_call.1} parent=11 // pred_check
          %p398 = pneg %p257
        $region50: #{tpu_custom_call.1} parent=11 // pred_check_branch
          %400 = sbr.rel (%p398) target = $region52
        $region51: #{tpu_custom_call.1} parent=11 // pred_region
          _
        $region52: #{tpu_custom_call.1} parent=11 // pred_fallthru
          _
        // Predicated region
        $region53: #{tpu_custom_call.1} parent=11 // pred_check
          %p401 = pneg %p278
        $region54: #{tpu_custom_call.1} parent=11 // pred_check_branch
          %403 = sbr.rel (%p401) target = $region56
        $region55: #{tpu_custom_call.1} parent=11 // pred_region
          _
        $region56: #{tpu_custom_call.1} parent=11 // pred_fallthru
          _
        // Predicated region
        $region57: #{tpu_custom_call.1} parent=11 // pred_check
          %p404 = pneg %p299
        $region58: #{tpu_custom_call.1} parent=11 // pred_check_branch
          %406 = sbr.rel (%p404) target = $region60
        $region59: #{tpu_custom_call.1} parent=11 // pred_region
          _
        $region60: #{tpu_custom_call.1} parent=11 // pred_fallthru
          _
        // Predicated region
        $region61: #{tpu_custom_call.1} parent=11 // pred_check
          %p407 = pneg %p320
        $region62: #{tpu_custom_call.1} parent=11 // pred_check_branch
          %409 = sbr.rel (%p407) target = $region64
        $region63: #{tpu_custom_call.1} parent=11 // pred_region
          _
        $region64: #{tpu_custom_call.1} parent=11 // pred_fallthru
          _
      $region12: #{tpu_custom_call.1} parent=5 // pred_fallthru
        _
      %p410 = scmp.lt.s32.totalorder %s20, 3
      // Predicated region
      $region65: #{tpu_custom_call.1} parent=5 // pred_check
        %p411 = pneg %p410
      $region66: #{tpu_custom_call.1} parent=5 // pred_check_branch
        %413 = sbr.rel (%p411) target = $region68
      $region67: #{tpu_custom_call.1} parent=5 // pred_region
        _
      $region68: #{tpu_custom_call.1} parent=5 // pred_fallthru
        _
      %p414 = scmp.le.s32.totalorder 1, %s20
      %p415 = scmp.lt.s32.totalorder %s20, 4
      %p416 = pnand %p414, %p415
      %p417 = pneg %p416
      // Predicated region
      $region69: #{tpu_custom_call.1} parent=5 // pred_check
        _
      $region70: #{tpu_custom_call.1} parent=5 // pred_check_branch
        %419 = sbr.rel (%p416) target = $region72
      $region71: #{tpu_custom_call.1} parent=5 // pred_region
        %s420 = ssub.s32 %s20, 1
        %s421 = smul.u32 4, %s30
        %p422 = scmp.lt.s32.totalorder %s421, 3
        %s423 = scalar_select %p422, %s421, 3
        %s424 = smul.addr %s423, 8
        %s425 = scalar_lea.vmem %s0, %s424
        %p426 = pneg %p58
        %p427 = pneg %p55
        %p428 = scmp.lt.s32.totalorder %s30, 0
        %s429 = scalar_select %p428, %s30, 0
        %s430 = scalar_lea.vmem %s1, %s429
        %p431 = pneg %p84
        %p432 = pneg %p81
        %p433 = pneg %p105
        %p434 = pneg %p102
        %s435 = smul.u32 4, %s30
        %p436 = scmp.lt.s32.totalorder %s435, 3
        %s437 = scalar_select %p436, %s435, 3
        %s438 = smul.addr %s437, 8
        %s439 = scalar_lea.vmem %s3, %s438
        %p440 = pneg %p131
        %p441 = pneg %p128
        %p442 = pneg %p152
        %p443 = pneg %p149
        %p444 = pneg %p173
        %p445 = pneg %p170
        %p446 = pneg %p194
        %p447 = pneg %p191
        %p448 = pneg %p215
        %p449 = pneg %p212
        %p450 = pneg %p236
        %p451 = pneg %p233
        %p452 = pneg %p257
        %p453 = pneg %p254
        %p454 = pneg %p278
        %p455 = pneg %p275
        %p456 = pneg %p299
        %p457 = pneg %p296
        %p458 = pneg %p320
        %p459 = pneg %p317
        %p460 = pneg %p341
        %p461 = pneg %p338
        %s462 = smul.u32 4, %s30
        %p463 = scmp.lt.s32.totalorder %s462, 3
        %s464 = scalar_select %p463, %s462, 3
        %s465 = smul.addr %s464, 8
        %s466 = scalar_lea.vmem %s0, %s465
        %s467 = smul.u32 4, %s30
        %p468 = scmp.lt.s32.totalorder %s30, 0
        %s469 = scalar_select %p468, %s30, 0
        %s470 = scalar_lea.vmem %s1, %s469
        %s471 = smul.u32 4, %s30
        %p472 = scmp.lt.s32.totalorder %s471, 3
        %s473 = scalar_select %p472, %s471, 3
        %s474 = smul.addr %s473, 8
        %s475 = scalar_lea.vmem %s3, %s474
        %s476 = smul.u32 4, %s30
        %p478 = scmp.eq.s32.totalorder %s29, 0
        %p479 = scmp.eq.s32.totalorder %s30, 0
        %p480 = pnand %p478, %p479
        %p481 = pneg %p480
        // Predicated region
        $region73: #{tpu_custom_call.1} parent=71 // pred_check
          _
        $region74: #{tpu_custom_call.1} parent=71 // pred_check_branch
          %483 = sbr.rel (%p480) target = $region76
        $region75: #{tpu_custom_call.1} parent=71 // pred_region
          %v484 = vld [vmem:[%s2] sm:$0xff]
          %v485 = vld [vmem:[%s2 + $0x8] sm:$0xff]
          %vm486 = vcmask 261120
          %487 = vst.msk [vmem:[#allocation2] sm:$0xff] %vm486, %v484
          %488 = vst.msk [vmem:[#allocation2 + $0x8] sm:$0xff] %vm486, %v485
        $region76: #{tpu_custom_call.1} parent=71 // pred_fallthru
          _
        // Predicated region
        $region77: #{tpu_custom_call.1} parent=71 // pred_check
          %p489 = pneg %p479
        $region78: #{tpu_custom_call.1} parent=71 // pred_check_branch
          %491 = sbr.rel (%p489) target = $region80
        $region79: #{tpu_custom_call.1} parent=71 // pred_region
          %vm492 = vcmask 261120
          %493 = vst.msk [vmem:[#allocation3] sm:$0xff] %vm492, 0.0
          %494 = vst.msk [vmem:[#allocation3 + $0x8] sm:$0xff] %vm492, 0.0
        $region80: #{tpu_custom_call.1} parent=71 // pred_fallthru
          _
        // Predicated region
        $region81: #{tpu_custom_call.1} parent=71 // pred_check
          %p495 = pneg %p478
        $region82: #{tpu_custom_call.1} parent=71 // pred_check_branch
          %497 = sbr.rel (%p495) target = $region84
        $region83: #{tpu_custom_call.1} parent=71 // pred_region
          %v498 = vld [vmem:[%s475] sm:$0xff]
          %v499 = vld [vmem:[%s475 + $0x8] sm:$0xff]
          %v500 = vld [vmem:[%s475 + $0x10] sm:$0xff]
          %v501 = vld [vmem:[%s475 + $0x18] sm:$0xff]
          %v502 = vld [vmem:[%s4] sm:$0xff]
          %v503 = vld [vmem:[%s5] sm:$0x1]
          %v505 = vlaneseq
          %v506 = vshrl.u32 %v505, 7
          %v507 = vsub.s32 0, %v506
          %v508 = vrot.slane %v503, %v507
          %vm510 = vcmask 64512
          %v512 = vsel %vm510, %v498, 0
          %v515 = vsel %vm510, %v499, 0
          %v518 = vsel %vm510, %v500, 0
          %v521 = vsel %vm510, %v501, 0
          %523 = vmatprep.subr.mxu0 0.0
          %524 = vmatpush1.msra.mxu0 0.0
          %525 = vmatprep.subr.mxu0 0.0
          %526 = vmatpush1.msra.mxu0 0.0
          %527 = vmatprep.subr.mxu0 0.0
          %528 = vmatpush1.msra.mxu0 0.0
          %529 = vmatprep.subr.mxu0 0.0
          %530 = vmatpush1.msra.mxu0 0.0
          %531 = vmatprep.subr.mxu0 0.0
          %532 = vmatpush1.msra.mxu0 0.0
          %533 = vmatprep.subr.mxu0 0.0
          %534 = vmatpush1.msra.mxu0 0.0
          %535 = vmatprep.subr.mxu0 0.0
          %536 = vmatpush1.msra.mxu0 0.0
          %537 = vmatprep.subr.mxu0 0.0
          %538 = vmatpush1.msra.mxu0 0.0
          %539 = vmatprep.subr.mxu0 0.0
          %540 = vmatpush1.msra.mxu0 0.0
          %541 = vmatprep.subr.mxu0 0.0
          %542 = vmatpush1.msra.mxu0 0.0
          %543 = vmatprep.subr.mxu0 0.0
          %544 = vmatpush1.msra.mxu0 0.0
          %545 = vmatprep.subr.mxu0 0.0
          %546 = vmatpush1.msra.mxu0 0.0
          %547 = vmatprep.subr.mxu0 0.0
          %548 = vmatpush1.msra.mxu0 0.0
          %549 = vmatprep.subr.mxu0 0.0
          %550 = vmatpush1.msra.mxu0 0.0
          %551 = vmatprep.subr.mxu0 0.0
          %552 = vmatpush1.msra.mxu0 0.0
          %553 = vmatprep.subr.mxu0 0.0
          %554 = vmatpush1.msra.mxu0 %v502
          %555 = vmatprep.subr.mxu0 0.0
          %556 = vmatpush2.msra.mxu0 0.0
          %557 = vmatprep.subr.mxu0 0.0
          %558 = vmatpush2.msra.mxu0 0.0
          %559 = vmatprep.subr.mxu0 0.0
          %560 = vmatpush2.msra.mxu0 0.0
          %561 = vmatprep.subr.mxu0 0.0
          %562 = vmatpush2.msra.mxu0 0.0
          %563 = vmatprep.subr.mxu0 0.0
          %564 = vmatpush2.msra.mxu0 0.0
          %565 = vmatprep.subr.mxu0 0.0
          %566 = vmatpush2.msra.mxu0 0.0
          %567 = vmatprep.subr.mxu0 0.0
          %568 = vmatpush2.msra.mxu0 0.0
          %569 = vmatprep.subr.mxu0 0.0
          %570 = vmatpush2.msra.mxu0 0.0
          %571 = vmatprep.subr.mxu0 0.0
          %572 = vmatpush2.msra.mxu0 0.0
          %573 = vmatprep.subr.mxu0 0.0
          %574 = vmatpush2.msra.mxu0 0.0
          %575 = vmatprep.subr.mxu0 0.0
          %576 = vmatpush2.msra.mxu0 0.0
          %577 = vmatprep.subr.mxu0 0.0
          %578 = vmatpush2.msra.mxu0 0.0
          %579 = vmatprep.subr.mxu0 0.0
          %580 = vmatpush2.msra.mxu0 0.0
          %581 = vmatprep.subr.mxu0 0.0
          %582 = vmatpush2.msra.mxu0 0.0
          %583 = vmatprep.subr.mxu0 0.0
          %584 = vmatpush2.msra.mxu0 0.0
          %585 = vmatprep.subr.mxu0 0.0
          %586 = vmatpush2.msra.mxu0 0.0
          %587 = vmatprep.mubr.f32.mxu0 0.0
          %588 = vmatmul.mubr.f32.gmra.mxu0 %v512
          %v589 = vpop.f32.mrf.mxu0
          %v590 = vadd.f32 %v508, %v589
          %v591 = vpop.f32.mrf.mxu0
          %592 = vmatprep.mubr.f32.mxu0 0.0
          %593 = vmatmul.mubr.f32.gmra.mxu0 %v515
          %v594 = vpop.f32.mrf.mxu0
          %v595 = vadd.f32 %v508, %v594
          %v596 = vpop.f32.mrf.mxu0
          %597 = vmatprep.mubr.f32.mxu0 0.0
          %598 = vmatmul.mubr.f32.gmra.mxu0 %v518
          %v599 = vpop.f32.mrf.mxu0
          %v600 = vadd.f32 %v508, %v599
          %v601 = vpop.f32.mrf.mxu0
          %602 = vmatprep.mubr.f32.mxu0 0.0
          %603 = vmatmul.mubr.f32.gmra.mxu0 %v521
          %v604 = vpop.f32.mrf.mxu0
          %v605 = vadd.f32 %v508, %v604
          %v606 = vpop.f32.mrf.mxu0
          %607 = vdwg.mxu0
          %v608 = vmax.f32 %v590, 0.0
          %v609 = vmax.f32 %v595, 0.0
          %v610 = vmax.f32 %v600, 0.0
          %v611 = vmax.f32 %v605, 0.0
          %s612 = smul.u32 %s30, 32
          %s613 = scalar_lea.vmem [#allocation4], %s612
          %614 = vst [vmem:[%s613] sm:$0xff] %v608
          %615 = vst [vmem:[%s613 + $0x8] sm:$0xff] %v609
          %616 = vst [vmem:[%s613 + $0x10] sm:$0xff] %v610
          %617 = vst [vmem:[%s613 + $0x18] sm:$0xff] %v611
        $region84: #{tpu_custom_call.1} parent=71 // pred_fallthru
          _
        %s618 = smul.u32 %s30, 32
        %s619 = scalar_lea.vmem [#allocation4], %s618
        %v620 = vld [vmem:[%s619] sm:$0xff]
        %v621 = vld [vmem:[%s619 + $0x8] sm:$0xff]
        %v622 = vld [vmem:[%s619 + $0x10] sm:$0xff]
        %v623 = vld [vmem:[%s619 + $0x18] sm:$0xff]
        %v624 = vlaneseq
        %v625 = vand.u32 %v624, 127
        %v626 = vld [vmem:[%s466] sm:$0xff]
        %v627 = vld [vmem:[%s466 + $0x8] sm:$0xff]
        %v628 = vld [vmem:[%s466 + $0x10] sm:$0xff]
        %v629 = vld [vmem:[%s466 + $0x18] sm:$0xff]
        %630 = vset.pattern.permute.xlu0 0
        %631 = vperm.xlu0 %630, %v626
        %v632 = vpop.permute.xlu0 %631
        %633 = vset.pattern.permute.xlu0 0
        %634 = vperm.xlu0 %633, %v627
        %v635 = vpop.permute.xlu0 %634
        %636 = vset.pattern.permute.xlu0 0
        %637 = vperm.xlu0 %636, %v628
        %v638 = vpop.permute.xlu0 %637
        %639 = vset.pattern.permute.xlu0 0
        %640 = vperm.xlu0 %639, %v629
        %v641 = vpop.permute.xlu0 %640
        %vm642 = vcmp.eq.s32.totalorder %v625, %v632
        %vm643 = vcmp.eq.s32.totalorder %v625, %v635
        %vm644 = vcmp.eq.s32.totalorder %v625, %v638
        %vm645 = vcmp.eq.s32.totalorder %v625, %v641
        %v646 = vsel %vm642, 1.0, 0.0
        %v647 = vsel %vm643, 1.0, 0.0
        %v648 = vsel %vm644, 1.0, 0.0
        %v649 = vsel %vm645, 1.0, 0.0
        %v650 = vpack.c.bf16 %v647, %v646
        %v651 = vpack.c.bf16 %v649, %v648
        %v652 = vld [vmem:[#allocation2] sm:$0xff]
        %v653 = vld [vmem:[#allocation2 + $0x8] sm:$0xff]
        %v654 = vpack.c.bf16 %v653, %v652
        %v655 = vunpack.c.l.bf16 %v654
        %v656 = vunpack.c.h.bf16 %v654
        %v657 = vsub.f32 %v652, %v655
        %v658 = vsub.f32 %v653, %v656
        %v659 = vpack.c.bf16 %v658, %v657
        %vm660 = vcmask 130048
        %v662 = vsel %vm660, %v650, 0
        %v665 = vsel %vm660, %v651, 0
        %667 = vmatprep.subr.bf16.mxu0 0
        %668 = vmatpush1.bf16.msra.mxu0 0
        %669 = vmatprep.subr.bf16.mxu0 0
        %670 = vmatpush1.bf16.msra.mxu0 0
        %671 = vmatprep.subr.bf16.mxu0 0
        %672 = vmatpush1.bf16.msra.mxu0 0
        %673 = vmatprep.subr.bf16.mxu0 0
        %674 = vmatpush1.bf16.msra.mxu0 0
        %675 = vmatprep.subr.bf16.mxu0 0
        %676 = vmatpush1.bf16.msra.mxu0 0
        %677 = vmatprep.subr.bf16.mxu0 0
        %678 = vmatpush1.bf16.msra.mxu0 0
        %679 = vmatprep.subr.bf16.mxu0 0
        %680 = vmatpush1.bf16.msra.mxu0 0
        %681 = vmatprep.subr.bf16.mxu0 0
        %682 = vmatpush1.bf16.msra.mxu0 %v659
        %683 = vmatprep.subr.bf16.mxu0 0
        %684 = vmatpush2.bf16.msra.mxu0 0
        %685 = vmatprep.subr.bf16.mxu0 0
        %686 = vmatpush2.bf16.msra.mxu0 0
        %687 = vmatprep.subr.bf16.mxu0 0
        %688 = vmatpush2.bf16.msra.mxu0 0
        %689 = vmatprep.subr.bf16.mxu0 0
        %690 = vmatpush2.bf16.msra.mxu0 0
        %691 = vmatprep.subr.bf16.mxu0 0
        %692 = vmatpush2.bf16.msra.mxu0 0
        %693 = vmatprep.subr.bf16.mxu0 0
        %694 = vmatpush2.bf16.msra.mxu0 0
        %695 = vmatprep.subr.bf16.mxu0 0
        %696 = vmatpush2.bf16.msra.mxu0 0
        %697 = vmatprep.subr.bf16.mxu0 0
        %698 = vmatpush2.bf16.msra.mxu0 0
        %699 = vmatprep.mubr.bf16.mxu0 0
        %700 = vmatmul.mubr.bf16.gmra.mxu0 %v662
        %v701 = vpop.f32.mrf.mxu0
        %v702 = vadd.f32 0.0, %v701
        %v703 = vpop.f32.mrf.mxu0
        %v704 = vpop.f32.mrf.mxu0
        %v705 = vadd.f32 0.0, %v704
        %v706 = vpop.f32.mrf.mxu0
        %707 = vmatprep.mubr.bf16.mxu0 0
        %708 = vmatmul.mubr.bf16.gmra.mxu0 %v665
        %v709 = vpop.f32.mrf.mxu0
        %v710 = vadd.f32 0.0, %v709
        %v711 = vpop.f32.mrf.mxu0
        %v712 = vpop.f32.mrf.mxu0
        %v713 = vadd.f32 0.0, %v712
        %v714 = vpop.f32.mrf.mxu0
        %715 = vdwg.mxu0
        %716 = vmatprep.subr.bf16.mxu0 0
        %717 = vmatpush1.bf16.msra.mxu0 0
        %718 = vmatprep.subr.bf16.mxu0 0
        %719 = vmatpush1.bf16.msra.mxu0 0
        %720 = vmatprep.subr.bf16.mxu0 0
        %721 = vmatpush1.bf16.msra.mxu0 0
        %722 = vmatprep.subr.bf16.mxu0 0
        %723 = vmatpush1.bf16.msra.mxu0 0
        %724 = vmatprep.subr.bf16.mxu0 0
        %725 = vmatpush1.bf16.msra.mxu0 0
        %726 = vmatprep.subr.bf16.mxu0 0
        %727 = vmatpush1.bf16.msra.mxu0 0
        %728 = vmatprep.subr.bf16.mxu0 0
        %729 = vmatpush1.bf16.msra.mxu0 0
        %730 = vmatprep.subr.bf16.mxu0 0
        %731 = vmatpush1.bf16.msra.mxu0 %v654
        %732 = vmatprep.subr.bf16.mxu0 0
        %733 = vmatpush2.bf16.msra.mxu0 0
        %734 = vmatprep.subr.bf16.mxu0 0
        %735 = vmatpush2.bf16.msra.mxu0 0
        %736 = vmatprep.subr.bf16.mxu0 0
        %737 = vmatpush2.bf16.msra.mxu0 0
        %738 = vmatprep.subr.bf16.mxu0 0
        %739 = vmatpush2.bf16.msra.mxu0 0
        %740 = vmatprep.subr.bf16.mxu0 0
        %741 = vmatpush2.bf16.msra.mxu0 0
        %742 = vmatprep.subr.bf16.mxu0 0
        %743 = vmatpush2.bf16.msra.mxu0 0
        %744 = vmatprep.subr.bf16.mxu0 0
        %745 = vmatpush2.bf16.msra.mxu0 0
        %746 = vmatprep.subr.bf16.mxu0 0
        %747 = vmatpush2.bf16.msra.mxu0 0
        %748 = vmatprep.mubr.bf16.mxu0 0
        %749 = vmatmul.mubr.bf16.gmra.mxu0 %v662
        %v750 = vpop.f32.mrf.mxu0
        %v751 = vadd.f32 %v702, %v750
        %v752 = vpop.f32.mrf.mxu0
        %v753 = vpop.f32.mrf.mxu0
        %v754 = vadd.f32 %v705, %v753
        %v755 = vpop.f32.mrf.mxu0
        %756 = vmatprep.mubr.bf16.mxu0 0
        %757 = vmatmul.mubr.bf16.gmra.mxu0 %v665
        %v758 = vpop.f32.mrf.mxu0
        %v759 = vadd.f32 %v710, %v758
        %v760 = vpop.f32.mrf.mxu0
        %v761 = vpop.f32.mrf.mxu0
        %v762 = vadd.f32 %v713, %v761
        %v763 = vpop.f32.mrf.mxu0
        %764 = vdwg.mxu0
        %769 = vrot.lane.b32.xlu0 %v751, 32
        %v770 = vpop.permute.xlu0 %769
        %771 = vrot.lane.b32.xlu0 %v754, 32
        %v772 = vpop.permute.xlu0 %771
        %773 = vrot.lane.b32.xlu0 %v759, 32
        %v774 = vpop.permute.xlu0 %773
        %775 = vrot.lane.b32.xlu0 %v762, 32
        %v776 = vpop.permute.xlu0 %775
        %781 = vrot.lane.b32.xlu0 %v751, 64
        %v782 = vpop.permute.xlu0 %781
        %783 = vrot.lane.b32.xlu0 %v754, 64
        %v784 = vpop.permute.xlu0 %783
        %785 = vrot.lane.b32.xlu0 %v759, 64
        %v786 = vpop.permute.xlu0 %785
        %787 = vrot.lane.b32.xlu0 %v762, 64
        %v788 = vpop.permute.xlu0 %787
        %793 = vrot.lane.b32.xlu0 %v751, 96
        %v794 = vpop.permute.xlu0 %793
        %795 = vrot.lane.b32.xlu0 %v754, 96
        %v796 = vpop.permute.xlu0 %795
        %797 = vrot.lane.b32.xlu0 %v759, 96
        %v798 = vpop.permute.xlu0 %797
        %799 = vrot.lane.b32.xlu0 %v762, 96
        %v800 = vpop.permute.xlu0 %799
        %vm805 = vcmask 261120
        %v806 = vsel %vm805, %v751, %v770
        %v807 = vsel %vm805, %v754, %v772
        %v808 = vsel %vm805, %v759, %v774
        %v809 = vsel %vm805, %v762, %v776
        %vm810 = vcmask 523264
        %v811 = vsel %vm810, %v806, %v782
        %v812 = vsel %vm810, %v807, %v784
        %v813 = vsel %vm810, %v808, %v786
        %v814 = vsel %vm810, %v809, %v788
        %vm815 = vcmask 785408
        %v816 = vsel %vm815, %v811, %v794
        %v817 = vsel %vm815, %v812, %v796
        %v818 = vsel %vm815, %v813, %v798
        %v819 = vsel %vm815, %v814, %v800
        %v820 = vmul.f32 %v620, %v816
        %v821 = vmul.f32 %v621, %v817
        %v822 = vmul.f32 %v622, %v818
        %v823 = vmul.f32 %v623, %v819
        %v824 = vld [vmem:[%s6] sm:$0xff]
        %v825 = vld [vmem:[%s6 + $0x8] sm:$0xff]
        %v826 = vld [vmem:[%s6 + $0x10] sm:$0xff]
        %v827 = vld [vmem:[%s6 + $0x18] sm:$0xff]
        %v828 = vld [vmem:[%s6 + $0x20] sm:$0xff]
        %v829 = vld [vmem:[%s6 + $0x28] sm:$0xff]
        %v830 = vld [vmem:[%s6 + $0x30] sm:$0xff]
        %v831 = vld [vmem:[%s6 + $0x38] sm:$0xff]
        %v832 = vld [vmem:[%s6 + $0x40] sm:$0xff]
        %v833 = vld [vmem:[%s6 + $0x48] sm:$0xff]
        %v834 = vld [vmem:[%s6 + $0x50] sm:$0xff]
        %v835 = vld [vmem:[%s6 + $0x58] sm:$0xff]
        %v836 = vld [vmem:[%s6 + $0x60] sm:$0xff]
        %v837 = vld [vmem:[%s6 + $0x68] sm:$0xff]
        %v838 = vld [vmem:[%s6 + $0x70] sm:$0xff]
        %v839 = vld [vmem:[%s6 + $0x78] sm:$0xff]
        %840 = vmatprep.subr.mxu0 0.0
        %841 = vmatpush1.msra.mxu0 %v839
        %842 = vmatprep.subr.mxu0 0.0
        %843 = vmatpush1.msra.mxu0 %v838
        %844 = vmatprep.subr.mxu0 0.0
        %845 = vmatpush1.msra.mxu0 %v837
        %846 = vmatprep.subr.mxu0 0.0
        %847 = vmatpush1.msra.mxu0 %v836
        %848 = vmatprep.subr.mxu0 0.0
        %849 = vmatpush1.msra.mxu0 %v835
        %850 = vmatprep.subr.mxu0 0.0
        %851 = vmatpush1.msra.mxu0 %v834
        %852 = vmatprep.subr.mxu0 0.0
        %853 = vmatpush1.msra.mxu0 %v833
        %854 = vmatprep.subr.mxu0 0.0
        %855 = vmatpush1.msra.mxu0 %v832
        %856 = vmatprep.subr.mxu0 0.0
        %857 = vmatpush1.msra.mxu0 %v831
        %858 = vmatprep.subr.mxu0 0.0
        %859 = vmatpush1.msra.mxu0 %v830
        %860 = vmatprep.subr.mxu0 0.0
        %861 = vmatpush1.msra.mxu0 %v829
        %862 = vmatprep.subr.mxu0 0.0
        %863 = vmatpush1.msra.mxu0 %v828
        %864 = vmatprep.subr.mxu0 0.0
        %865 = vmatpush1.msra.mxu0 %v827
        %866 = vmatprep.subr.mxu0 0.0
        %867 = vmatpush1.msra.mxu0 %v826
        %868 = vmatprep.subr.mxu0 0.0
        %869 = vmatpush1.msra.mxu0 %v825
        %870 = vmatprep.subr.mxu0 0.0
        %871 = vmatpush1.msra.mxu0 %v824
        %872 = vmatprep.subr.mxu0 0.0
        %873 = vmatpush2.msra.mxu0 0.0
        %874 = vmatprep.subr.mxu0 0.0
        %875 = vmatpush2.msra.mxu0 0.0
        %876 = vmatprep.subr.mxu0 0.0
        %877 = vmatpush2.msra.mxu0 0.0
        %878 = vmatprep.subr.mxu0 0.0
        %879 = vmatpush2.msra.mxu0 0.0
        %880 = vmatprep.subr.mxu0 0.0
        %881 = vmatpush2.msra.mxu0 0.0
        %882 = vmatprep.subr.mxu0 0.0
        %883 = vmatpush2.msra.mxu0 0.0
        %884 = vmatprep.subr.mxu0 0.0
        %885 = vmatpush2.msra.mxu0 0.0
        %886 = vmatprep.subr.mxu0 0.0
        %887 = vmatpush2.msra.mxu0 0.0
        %888 = vmatprep.subr.mxu0 0.0
        %889 = vmatpush2.msra.mxu0 0.0
        %890 = vmatprep.subr.mxu0 0.0
        %891 = vmatpush2.msra.mxu0 0.0
        %892 = vmatprep.subr.mxu0 0.0
        %893 = vmatpush2.msra.mxu0 0.0
        %894 = vmatprep.subr.mxu0 0.0
        %895 = vmatpush2.msra.mxu0 0.0
        %896 = vmatprep.subr.mxu0 0.0
        %897 = vmatpush2.msra.mxu0 0.0
        %898 = vmatprep.subr.mxu0 0.0
        %899 = vmatpush2.msra.mxu0 0.0
        %900 = vmatprep.subr.mxu0 0.0
        %901 = vmatpush2.msra.mxu0 0.0
        %902 = vmatprep.subr.mxu0 0.0
        %903 = vmatpush2.msra.mxu0 0.0
        %904 = vmatprep.mubr.f32.mxu0 0.0
        %905 = vmatmul.mubr.f32.gmra.mxu0 %v820
        %v906 = vpop.f32.mrf.mxu0
        %v907 = vadd.f32 0.0, %v906
        %v908 = vpop.f32.mrf.mxu0
        %909 = vmatprep.mubr.f32.mxu0 0.0
        %910 = vmatmul.mubr.f32.gmra.mxu0 %v821
        %v911 = vpop.f32.mrf.mxu0
        %v912 = vadd.f32 0.0, %v911
        %v913 = vpop.f32.mrf.mxu0
        %914 = vmatprep.mubr.f32.mxu0 0.0
        %915 = vmatmul.mubr.f32.gmra.mxu0 %v822
        %v916 = vpop.f32.mrf.mxu0
        %v917 = vadd.f32 0.0, %v916
        %v918 = vpop.f32.mrf.mxu0
        %919 = vmatprep.mubr.f32.mxu0 0.0
        %920 = vmatmul.mubr.f32.gmra.mxu0 %v823
        %v921 = vpop.f32.mrf.mxu0
        %v922 = vadd.f32 0.0, %v921
        %v923 = vpop.f32.mrf.mxu0
        %924 = vdwg.mxu0
        %v925 = vlaneseq
        %v926 = vshrl.u32 %v925, 7
        %v927 = vadd.s32 %v926, 8
        %v928 = vld [vmem:[%s470] sm:$0x1]
        %v929 = vlaneseq
        %v930 = vshrl.u32 %v929, 7
        %v931 = vsub.s32 0, %v930
        %v932 = vrot.slane %v928, %v931
        %vm933 = vcmp.eq.s32.totalorder %v926, %v932
        %vm934 = vcmp.eq.s32.totalorder %v927, %v932
        %v935 = vsel %vm933, 1.0, 0.0
        %v936 = vsel %vm934, 1.0, 0.0
        %v937 = vpack.c.bf16 %v936, %v935
        %v938 = vld [vmem:[#allocation3] sm:$0xff]
        %v939 = vld [vmem:[#allocation3 + $0x8] sm:$0xff]
        %v940 = vpack.c.bf16 %v912, %v907
        %v941 = vpack.c.bf16 %v922, %v917
        %v942 = vunpack.c.l.bf16 %v940
        %v943 = vunpack.c.h.bf16 %v940
        %v944 = vunpack.c.l.bf16 %v941
        %v945 = vunpack.c.h.bf16 %v941
        %v946 = vsub.f32 %v907, %v942
        %v947 = vsub.f32 %v912, %v943
        %v948 = vsub.f32 %v917, %v944
        %v949 = vsub.f32 %v922, %v945
        %v950 = vpack.c.bf16 %v947, %v946
        %v951 = vpack.c.bf16 %v949, %v948
        %v953 = vsel %vm805, %v937, 0
        %955 = vmatprep.subr.bf16.mxu0 0
        %956 = vmatpush1.bf16.msra.mxu0 0
        %957 = vmatprep.subr.bf16.mxu0 0
        %958 = vmatpush1.bf16.msra.mxu0 0
        %959 = vmatprep.subr.bf16.mxu0 0
        %960 = vmatpush1.bf16.msra.mxu0 0
        %961 = vmatprep.subr.bf16.mxu0 0
        %962 = vmatpush1.bf16.msra.mxu0 0
        %963 = vmatprep.subr.bf16.mxu0 0
        %964 = vmatpush1.bf16.msra.mxu0 0
        %965 = vmatprep.subr.bf16.mxu0 0
        %966 = vmatpush1.bf16.msra.mxu0 0
        %967 = vmatprep.subr.bf16.mxu0 0
        %968 = vmatpush1.bf16.msra.mxu0 %v951
        %969 = vmatprep.subr.bf16.mxu0 0
        %970 = vmatpush1.bf16.msra.mxu0 %v950
        %971 = vmatprep.subr.bf16.mxu0 0
        %972 = vmatpush2.bf16.msra.mxu0 0
        %973 = vmatprep.subr.bf16.mxu0 0
        %974 = vmatpush2.bf16.msra.mxu0 0
        %975 = vmatprep.subr.bf16.mxu0 0
        %976 = vmatpush2.bf16.msra.mxu0 0
        %977 = vmatprep.subr.bf16.mxu0 0
        %978 = vmatpush2.bf16.msra.mxu0 0
        %979 = vmatprep.subr.bf16.mxu0 0
        %980 = vmatpush2.bf16.msra.mxu0 0
        %981 = vmatprep.subr.bf16.mxu0 0
        %982 = vmatpush2.bf16.msra.mxu0 0
        %983 = vmatprep.subr.bf16.mxu0 0
        %984 = vmatpush2.bf16.msra.mxu0 0
        %985 = vmatprep.subr.bf16.mxu0 0
        %986 = vmatpush2.bf16.msra.mxu0 0
        %987 = vmatprep.mubr.bf16.mxu0 0
        %988 = vmatmul.mubr.bf16.gmra.mxu0 %v953
        %v989 = vpop.f32.mrf.mxu0
        %v990 = vadd.f32 0.0, %v989
        %v991 = vpop.f32.mrf.mxu0
        %v992 = vpop.f32.mrf.mxu0
        %v993 = vadd.f32 0.0, %v992
        %v994 = vpop.f32.mrf.mxu0
        %995 = vdwg.mxu0
        %996 = vmatprep.subr.bf16.mxu0 0
        %997 = vmatpush1.bf16.msra.mxu0 0
        %998 = vmatprep.subr.bf16.mxu0 0
        %999 = vmatpush1.bf16.msra.mxu0 0
        %1000 = vmatprep.subr.bf16.mxu0 0
        %1001 = vmatpush1.bf16.msra.mxu0 0
        %1002 = vmatprep.subr.bf16.mxu0 0
        %1003 = vmatpush1.bf16.msra.mxu0 0
        %1004 = vmatprep.subr.bf16.mxu0 0
        %1005 = vmatpush1.bf16.msra.mxu0 0
        %1006 = vmatprep.subr.bf16.mxu0 0
        %1007 = vmatpush1.bf16.msra.mxu0 0
        %1008 = vmatprep.subr.bf16.mxu0 0
        %1009 = vmatpush1.bf16.msra.mxu0 %v941
        %1010 = vmatprep.subr.bf16.mxu0 0
        %1011 = vmatpush1.bf16.msra.mxu0 %v940
        %1012 = vmatprep.subr.bf16.mxu0 0
        %1013 = vmatpush2.bf16.msra.mxu0 0
        %1014 = vmatprep.subr.bf16.mxu0 0
        %1015 = vmatpush2.bf16.msra.mxu0 0
        %1016 = vmatprep.subr.bf16.mxu0 0
        %1017 = vmatpush2.bf16.msra.mxu0 0
        %1018 = vmatprep.subr.bf16.mxu0 0
        %1019 = vmatpush2.bf16.msra.mxu0 0
        %1020 = vmatprep.subr.bf16.mxu0 0
        %1021 = vmatpush2.bf16.msra.mxu0 0
        %1022 = vmatprep.subr.bf16.mxu0 0
        %1023 = vmatpush2.bf16.msra.mxu0 0
        %1024 = vmatprep.subr.bf16.mxu0 0
        %1025 = vmatpush2.bf16.msra.mxu0 0
        %1026 = vmatprep.subr.bf16.mxu0 0
        %1027 = vmatpush2.bf16.msra.mxu0 0
        %1028 = vmatprep.mubr.bf16.mxu0 0
        %1029 = vmatmul.mubr.bf16.gmra.mxu0 %v953
        %v1030 = vpop.f32.mrf.mxu0
        %v1031 = vadd.f32 %v990, %v1030
        %v1032 = vpop.f32.mrf.mxu0
        %v1033 = vpop.f32.mrf.mxu0
        %v1034 = vadd.f32 %v993, %v1033
        %v1035 = vpop.f32.mrf.mxu0
        %1036 = vdwg.mxu0
        %v1037 = vadd.f32 %v938, %v1031
        %v1038 = vadd.f32 %v939, %v1034
        %1039 = vst.msk [vmem:[#allocation3] sm:$0xff] %vm805, %v1037
        %1040 = vst.msk [vmem:[#allocation3 + $0x8] sm:$0xff] %vm805, %v1038
        // Predicated region
        $region85: #{tpu_custom_call.1} parent=71 // pred_check
          %p1041 = pneg %p479
        $region86: #{tpu_custom_call.1} parent=71 // pred_check_branch
          %1043 = sbr.rel (%p1041) target = $region88
        $region87: #{tpu_custom_call.1} parent=71 // pred_region
          %v1044 = vld [vmem:[#allocation2] sm:$0xff]
          %v1045 = vld [vmem:[#allocation2 + $0x8] sm:$0xff]
          %v1046 = vld [vmem:[#allocation3] sm:$0xff]
          %v1047 = vld [vmem:[#allocation3 + $0x8] sm:$0xff]
          %1050 = vrot.lane.b32.xlu0 %v1044, 32
          %v1051 = vpop.permute.xlu0 %1050
          %1052 = vrot.lane.b32.xlu0 %v1045, 32
          %v1053 = vpop.permute.xlu0 %1052
          %v1056 = vsel %vm805, %v1046, %v1051
          %v1057 = vsel %vm805, %v1047, %v1053
          %v1058 = vld [vmem:[%s7] sm:$0xff]
          %v1059 = vld [vmem:[%s7 + $0x8] sm:$0xff]
          %v1060 = vld [vmem:[%s7 + $0x10] sm:$0xff]
          %v1061 = vld [vmem:[%s7 + $0x18] sm:$0xff]
          %v1062 = vld [vmem:[%s7 + $0x20] sm:$0xff]
          %v1063 = vld [vmem:[%s7 + $0x28] sm:$0xff]
          %v1064 = vld [vmem:[%s7 + $0x30] sm:$0xff]
          %v1065 = vld [vmem:[%s7 + $0x38] sm:$0xff]
          %v1066 = vld [vmem:[%s8] sm:$0x1]
          %v1068 = vlaneseq
          %v1069 = vshrl.u32 %v1068, 7
          %v1070 = vsub.s32 0, %v1069
          %v1071 = vrot.slane %v1066, %v1070
          %v1074 = vsel %vm810, %v1056, 0
          %v1077 = vsel %vm810, %v1057, 0
          %1079 = vmatprep.subr.mxu0 0.0
          %1080 = vmatpush1.msra.mxu0 0.0
          %1081 = vmatprep.subr.mxu0 0.0
          %1082 = vmatpush1.msra.mxu0 0.0
          %1083 = vmatprep.subr.mxu0 0.0
          %1084 = vmatpush1.msra.mxu0 0.0
          %1085 = vmatprep.subr.mxu0 0.0
          %1086 = vmatpush1.msra.mxu0 0.0
          %1087 = vmatprep.subr.mxu0 0.0
          %1088 = vmatpush1.msra.mxu0 0.0
          %1089 = vmatprep.subr.mxu0 0.0
          %1090 = vmatpush1.msra.mxu0 0.0
          %1091 = vmatprep.subr.mxu0 0.0
          %1092 = vmatpush1.msra.mxu0 0.0
          %1093 = vmatprep.subr.mxu0 0.0
          %1094 = vmatpush1.msra.mxu0 0.0
          %1095 = vmatprep.subr.mxu0 0.0
          %1096 = vmatpush1.msra.mxu0 %v1065
          %1097 = vmatprep.subr.mxu0 0.0
          %1098 = vmatpush1.msra.mxu0 %v1064
          %1099 = vmatprep.subr.mxu0 0.0
          %1100 = vmatpush1.msra.mxu0 %v1063
          %1101 = vmatprep.subr.mxu0 0.0
          %1102 = vmatpush1.msra.mxu0 %v1062
          %1103 = vmatprep.subr.mxu0 0.0
          %1104 = vmatpush1.msra.mxu0 %v1061
          %1105 = vmatprep.subr.mxu0 0.0
          %1106 = vmatpush1.msra.mxu0 %v1060
          %1107 = vmatprep.subr.mxu0 0.0
          %1108 = vmatpush1.msra.mxu0 %v1059
          %1109 = vmatprep.subr.mxu0 0.0
          %1110 = vmatpush1.msra.mxu0 %v1058
          %1111 = vmatprep.subr.mxu0 0.0
          %1112 = vmatpush2.msra.mxu0 0.0
          %1113 = vmatprep.subr.mxu0 0.0
          %1114 = vmatpush2.msra.mxu0 0.0
          %1115 = vmatprep.subr.mxu0 0.0
          %1116 = vmatpush2.msra.mxu0 0.0
          %1117 = vmatprep.subr.mxu0 0.0
          %1118 = vmatpush2.msra.mxu0 0.0
          %1119 = vmatprep.subr.mxu0 0.0
          %1120 = vmatpush2.msra.mxu0 0.0
          %1121 = vmatprep.subr.mxu0 0.0
          %1122 = vmatpush2.msra.mxu0 0.0
          %1123 = vmatprep.subr.mxu0 0.0
          %1124 = vmatpush2.msra.mxu0 0.0
          %1125 = vmatprep.subr.mxu0 0.0
          %1126 = vmatpush2.msra.mxu0 0.0
          %1127 = vmatprep.subr.mxu0 0.0
          %1128 = vmatpush2.msra.mxu0 0.0
          %1129 = vmatprep.subr.mxu0 0.0
          %1130 = vmatpush2.msra.mxu0 0.0
          %1131 = vmatprep.subr.mxu0 0.0
          %1132 = vmatpush2.msra.mxu0 0.0
          %1133 = vmatprep.subr.mxu0 0.0
          %1134 = vmatpush2.msra.mxu0 0.0
          %1135 = vmatprep.subr.mxu0 0.0
          %1136 = vmatpush2.msra.mxu0 0.0
          %1137 = vmatprep.subr.mxu0 0.0
          %1138 = vmatpush2.msra.mxu0 0.0
          %1139 = vmatprep.subr.mxu0 0.0
          %1140 = vmatpush2.msra.mxu0 0.0
          %1141 = vmatprep.subr.mxu0 0.0
          %1142 = vmatpush2.msra.mxu0 0.0
          %1143 = vmatprep.mubr.f32.mxu0 0.0
          %1144 = vmatmul.mubr.f32.gmra.mxu0 %v1074
          %v1145 = vpop.f32.mrf.mxu0
          %v1146 = vadd.f32 %v1071, %v1145
          %v1147 = vpop.f32.mrf.mxu0
          %1148 = vmatprep.mubr.f32.mxu0 0.0
          %1149 = vmatmul.mubr.f32.gmra.mxu0 %v1077
          %v1150 = vpop.f32.mrf.mxu0
          %v1151 = vadd.f32 %v1071, %v1150
          %v1152 = vpop.f32.mrf.mxu0
          %1153 = vdwg.mxu0
          %v1154 = vxor.u32 %v1146, 2147483648
          %v1155 = vxor.u32 %v1151, 2147483648
          %v1156 = vmul.f32 %v1154, 1.442695
          %v1157 = vpow.pop %v1156
          %v1158 = vmul.f32 %v1155, 1.442695
          %v1159 = vpow.pop %v1158
          %v1160 = vadd.f32 %v1157, 1.0
          %v1161 = vadd.f32 %v1159, 1.0
          %v1162 = vrcp.pop %v1160
          %v1163 = vmul.f32 1.0, %v1162
          %v1164 = vrcp.pop %v1161
          %v1165 = vmul.f32 1.0, %v1164
          %1168 = vrot.lane.b32.xlu0 %v1146, 32
          %v1169 = vpop.permute.xlu0 %1168
          %1170 = vrot.lane.b32.xlu0 %v1151, 32
          %v1171 = vpop.permute.xlu0 %1170
          %v1174 = vmul.f32 %v1163, %v1169
          %v1175 = vmul.f32 %v1165, %v1171
          %1178 = vrot.lane.b32.xlu0 %v1174, 64
          %v1179 = vpop.permute.xlu0 %1178
          %1180 = vrot.lane.b32.xlu0 %v1175, 64
          %v1181 = vpop.permute.xlu0 %1180
          %v1184 = vadd.f32 %v1146, %v1179
          %v1185 = vadd.f32 %v1151, %v1181
          %v1186 = vtanh.pop %v1184
          %v1187 = vtanh.pop %v1185
          %v1188 = vsub.f32 1.0, %v1163
          %v1189 = vsub.f32 1.0, %v1165
          %1192 = vrot.lane.b32.xlu0 %v1186, 96
          %v1193 = vpop.permute.xlu0 %1192
          %1194 = vrot.lane.b32.xlu0 %v1187, 96
          %v1195 = vpop.permute.xlu0 %1194
          %v1198 = vmul.f32 %v1188, %v1193
          %v1199 = vmul.f32 %v1189, %v1195
          %v1200 = vmul.f32 %v1163, %v1051
          %v1201 = vmul.f32 %v1165, %v1053
          %v1202 = vadd.f32 %v1198, %v1200
          %v1203 = vadd.f32 %v1199, %v1201
          %1206 = vrot.lane.b32.xlu0 %v1202, 96
          %v1207 = vpop.permute.xlu0 %1206
          %1208 = vrot.lane.b32.xlu0 %v1203, 96
          %v1209 = vpop.permute.xlu0 %1208
          %1212 = vst.msk [vmem:[#allocation2] sm:$0xff] %vm805, %v1207
          %1213 = vst.msk [vmem:[#allocation2 + $0x8] sm:$0xff] %vm805, %v1209
        $region88: #{tpu_custom_call.1} parent=71 // pred_fallthru
          _
        %p1214 = scmp.eq.s32.totalorder %s29, 2
        %p1215 = pnand %p1214, %p479
        %p1216 = pneg %p1215
        // Predicated region
        $region89: #{tpu_custom_call.1} parent=71 // pred_check
          _
        $region90: #{tpu_custom_call.1} parent=71 // pred_check_branch
          %1218 = sbr.rel (%p1215) target = $region92
        $region91: #{tpu_custom_call.1} parent=71 // pred_region
          %v1219 = vld [vmem:[#allocation2] sm:$0xff]
          %v1220 = vld [vmem:[#allocation2 + $0x8] sm:$0xff]
          %v1221 = vld [vmem:[%s9] sm:$0xff]
          %v1222 = vld [vmem:[%s9 + $0x8] sm:$0xff]
          %v1223 = vld [vmem:[%s9 + $0x10] sm:$0xff]
          %v1224 = vld [vmem:[%s9 + $0x18] sm:$0xff]
          %v1225 = vld [vmem:[%s10] sm:$0x1]
          %v1227 = vlaneseq
          %v1228 = vshrl.u32 %v1227, 7
          %v1229 = vsub.s32 0, %v1228
          %v1230 = vrot.slane %v1225, %v1229
          %v1233 = vsel %vm805, %v1219, 0
          %v1236 = vsel %vm805, %v1220, 0
          %1238 = vmatprep.subr.mxu0 0.0
          %1239 = vmatpush1.msra.mxu0 0.0
          %1240 = vmatprep.subr.mxu0 0.0
          %1241 = vmatpush1.msra.mxu0 0.0
          %1242 = vmatprep.subr.mxu0 0.0
          %1243 = vmatpush1.msra.mxu0 0.0
          %1244 = vmatprep.subr.mxu0 0.0
          %1245 = vmatpush1.msra.mxu0 0.0
          %1246 = vmatprep.subr.mxu0 0.0
          %1247 = vmatpush1.msra.mxu0 0.0
          %1248 = vmatprep.subr.mxu0 0.0
          %1249 = vmatpush1.msra.mxu0 0.0
          %1250 = vmatprep.subr.mxu0 0.0
          %1251 = vmatpush1.msra.mxu0 0.0
          %1252 = vmatprep.subr.mxu0 0.0
          %1253 = vmatpush1.msra.mxu0 0.0
          %1254 = vmatprep.subr.mxu0 0.0
          %1255 = vmatpush1.msra.mxu0 0.0
          %1256 = vmatprep.subr.mxu0 0.0
          %1257 = vmatpush1.msra.mxu0 0.0
          %1258 = vmatprep.subr.mxu0 0.0
          %1259 = vmatpush1.msra.mxu0 0.0
          %1260 = vmatprep.subr.mxu0 0.0
          %1261 = vmatpush1.msra.mxu0 0.0
          %1262 = vmatprep.subr.mxu0 0.0
          %1263 = vmatpush1.msra.mxu0 %v1224
          %1264 = vmatprep.subr.mxu0 0.0
          %1265 = vmatpush1.msra.mxu0 %v1223
          %1266 = vmatprep.subr.mxu0 0.0
          %1267 = vmatpush1.msra.mxu0 %v1222
          %1268 = vmatprep.subr.mxu0 0.0
          %1269 = vmatpush1.msra.mxu0 %v1221
          %1270 = vmatprep.subr.mxu0 0.0
          %1271 = vmatpush2.msra.mxu0 0.0
          %1272 = vmatprep.subr.mxu0 0.0
          %1273 = vmatpush2.msra.mxu0 0.0
          %1274 = vmatprep.subr.mxu0 0.0
          %1275 = vmatpush2.msra.mxu0 0.0
          %1276 = vmatprep.subr.mxu0 0.0
          %1277 = vmatpush2.msra.mxu0 0.0
          %1278 = vmatprep.subr.mxu0 0.0
          %1279 = vmatpush2.msra.mxu0 0.0
          %1280 = vmatprep.subr.mxu0 0.0
          %1281 = vmatpush2.msra.mxu0 0.0
          %1282 = vmatprep.subr.mxu0 0.0
          %1283 = vmatpush2.msra.mxu0 0.0
          %1284 = vmatprep.subr.mxu0 0.0
          %1285 = vmatpush2.msra.mxu0 0.0
          %1286 = vmatprep.subr.mxu0 0.0
          %1287 = vmatpush2.msra.mxu0 0.0
          %1288 = vmatprep.subr.mxu0 0.0
          %1289 = vmatpush2.msra.mxu0 0.0
          %1290 = vmatprep.subr.mxu0 0.0
          %1291 = vmatpush2.msra.mxu0 0.0
          %1292 = vmatprep.subr.mxu0 0.0
          %1293 = vmatpush2.msra.mxu0 0.0
          %1294 = vmatprep.subr.mxu0 0.0
          %1295 = vmatpush2.msra.mxu0 0.0
          %1296 = vmatprep.subr.mxu0 0.0
          %1297 = vmatpush2.msra.mxu0 0.0
          %1298 = vmatprep.subr.mxu0 0.0
          %1299 = vmatpush2.msra.mxu0 0.0
          %1300 = vmatprep.subr.mxu0 0.0
          %1301 = vmatpush2.msra.mxu0 0.0
          %1302 = vmatprep.mubr.f32.mxu0 0.0
          %1303 = vmatmul.mubr.f32.gmra.mxu0 %v1233
          %v1304 = vpop.f32.mrf.mxu0
          %v1305 = vadd.f32 %v1230, %v1304
          %v1306 = vpop.f32.mrf.mxu0
          %1307 = vmatprep.mubr.f32.mxu0 0.0
          %1308 = vmatmul.mubr.f32.gmra.mxu0 %v1236
          %v1309 = vpop.f32.mrf.mxu0
          %v1310 = vadd.f32 %v1230, %v1309
          %v1311 = vpop.f32.mrf.mxu0
          %1312 = vdwg.mxu0
          %v1313 = vmax.f32 %v1305, 0.0
          %v1314 = vmax.f32 %v1310, 0.0
          %v1315 = vld [vmem:[%s11] sm:$0xff]
          %v1316 = vld [vmem:[%s11 + $0x8] sm:$0xff]
          %v1317 = vld [vmem:[%s11 + $0x10] sm:$0xff]
          %v1318 = vld [vmem:[%s11 + $0x18] sm:$0xff]
          %v1319 = vld [vmem:[%s12] sm:$0x1]
          %v1321 = vlaneseq
          %v1322 = vshrl.u32 %v1321, 7
          %v1323 = vsub.s32 0, %v1322
          %v1324 = vrot.slane %v1319, %v1323
          %v1327 = vsel %vm805, %v1313, 0
          %v1330 = vsel %vm805, %v1314, 0
          %1332 = vmatprep.subr.mxu0 0.0
          %1333 = vmatpush1.msra.mxu0 0.0
          %1334 = vmatprep.subr.mxu0 0.0
          %1335 = vmatpush1.msra.mxu0 0.0
          %1336 = vmatprep.subr.mxu0 0.0
          %1337 = vmatpush1.msra.mxu0 0.0
          %1338 = vmatprep.subr.mxu0 0.0
          %1339 = vmatpush1.msra.mxu0 0.0
          %1340 = vmatprep.subr.mxu0 0.0
          %1341 = vmatpush1.msra.mxu0 0.0
          %1342 = vmatprep.subr.mxu0 0.0
          %1343 = vmatpush1.msra.mxu0 0.0
          %1344 = vmatprep.subr.mxu0 0.0
          %1345 = vmatpush1.msra.mxu0 0.0
          %1346 = vmatprep.subr.mxu0 0.0
          %1347 = vmatpush1.msra.mxu0 0.0
          %1348 = vmatprep.subr.mxu0 0.0
          %1349 = vmatpush1.msra.mxu0 0.0
          %1350 = vmatprep.subr.mxu0 0.0
          %1351 = vmatpush1.msra.mxu0 0.0
          %1352 = vmatprep.subr.mxu0 0.0
          %1353 = vmatpush1.msra.mxu0 0.0
          %1354 = vmatprep.subr.mxu0 0.0
          %1355 = vmatpush1.msra.mxu0 0.0
          %1356 = vmatprep.subr.mxu0 0.0
          %1357 = vmatpush1.msra.mxu0 %v1318
          %1358 = vmatprep.subr.mxu0 0.0
          %1359 = vmatpush1.msra.mxu0 %v1317
          %1360 = vmatprep.subr.mxu0 0.0
          %1361 = vmatpush1.msra.mxu0 %v1316
          %1362 = vmatprep.subr.mxu0 0.0
          %1363 = vmatpush1.msra.mxu0 %v1315
          %1364 = vmatprep.subr.mxu0 0.0
          %1365 = vmatpush2.msra.mxu0 0.0
          %1366 = vmatprep.subr.mxu0 0.0
          %1367 = vmatpush2.msra.mxu0 0.0
          %1368 = vmatprep.subr.mxu0 0.0
          %1369 = vmatpush2.msra.mxu0 0.0
          %1370 = vmatprep.subr.mxu0 0.0
          %1371 = vmatpush2.msra.mxu0 0.0
          %1372 = vmatprep.subr.mxu0 0.0
          %1373 = vmatpush2.msra.mxu0 0.0
          %1374 = vmatprep.subr.mxu0 0.0
          %1375 = vmatpush2.msra.mxu0 0.0
          %1376 = vmatprep.subr.mxu0 0.0
          %1377 = vmatpush2.msra.mxu0 0.0
          %1378 = vmatprep.subr.mxu0 0.0
          %1379 = vmatpush2.msra.mxu0 0.0
          %1380 = vmatprep.subr.mxu0 0.0
          %1381 = vmatpush2.msra.mxu0 0.0
          %1382 = vmatprep.subr.mxu0 0.0
          %1383 = vmatpush2.msra.mxu0 0.0
          %1384 = vmatprep.subr.mxu0 0.0
          %1385 = vmatpush2.msra.mxu0 0.0
          %1386 = vmatprep.subr.mxu0 0.0
          %1387 = vmatpush2.msra.mxu0 0.0
          %1388 = vmatprep.subr.mxu0 0.0
          %1389 = vmatpush2.msra.mxu0 0.0
          %1390 = vmatprep.subr.mxu0 0.0
          %1391 = vmatpush2.msra.mxu0 0.0
          %1392 = vmatprep.subr.mxu0 0.0
          %1393 = vmatpush2.msra.mxu0 0.0
          %1394 = vmatprep.subr.mxu0 0.0
          %1395 = vmatpush2.msra.mxu0 0.0
          %1396 = vmatprep.mubr.f32.mxu0 0.0
          %1397 = vmatmul.mubr.f32.gmra.mxu0 %v1327
          %v1398 = vpop.f32.mrf.mxu0
          %v1399 = vadd.f32 %v1324, %v1398
          %v1400 = vpop.f32.mrf.mxu0
          %1401 = vmatprep.mubr.f32.mxu0 0.0
          %1402 = vmatmul.mubr.f32.gmra.mxu0 %v1330
          %v1403 = vpop.f32.mrf.mxu0
          %v1404 = vadd.f32 %v1324, %v1403
          %v1405 = vpop.f32.mrf.mxu0
          %1406 = vdwg.mxu0
          %1407 = vst.msk [vmem:[#allocation5] sm:$0xff] %vm805, %v1399
          %1408 = vst.msk [vmem:[#allocation5 + $0x8] sm:$0xff] %vm805, %v1404
        $region92: #{tpu_custom_call.1} parent=71 // pred_fallthru
          _
        // Predicated region
        $region93: #{tpu_custom_call.1} parent=71 // pred_check
          %p1409 = pneg %p338
        $region94: #{tpu_custom_call.1} parent=71 // pred_check_branch
          %1411 = sbr.rel (%p1409) target = $region96
        $region95: #{tpu_custom_call.1} parent=71 // pred_region
          %s1413 = ssub.s32 256, 256
          %1414 = vsyncadd [#allocation6], %s1413
          %s1415 = sshll.u32 [#allocation5], 4
          %s1416 = int_to_ptr.vmem [resolvable:$true] %s1415
          %1421 = dma.vmem_to_hbm [thread:$0]  %s1416, 256, %s13, [#allocation6], 128, 128, 8
        $region96: #{tpu_custom_call.1} parent=71 // pred_fallthru
          _
        // Predicated region
        $region97: #{tpu_custom_call.1} parent=71 // pred_check
          %p1422 = pneg %p338
        $region98: #{tpu_custom_call.1} parent=71 // pred_check_branch
          %1424 = sbr.rel (%p1422) target = $region100
        $region99: #{tpu_custom_call.1} parent=71 // pred_region
          %1425 = dma.done [#allocation6], 256
        $region100: #{tpu_custom_call.1} parent=71 // pred_fallthru
          _
      $region72: #{tpu_custom_call.1} parent=5 // pred_fallthru
        _
      %p1426 = scmp.le.s32.totalorder 2, %s20
      // Predicated region
      $region101: #{tpu_custom_call.1} parent=5 // pred_check
        %p1427 = pneg %p1426
      $region102: #{tpu_custom_call.1} parent=5 // pred_check_branch
        %1429 = sbr.rel (%p1427) target = $region104
      $region103: #{tpu_custom_call.1} parent=5 // pred_region
        %s1430 = ssub.s32 %s20, 2
      $region104: #{tpu_custom_call.1} parent=5 // pred_fallthru
        _
    $region6: #{tpu_custom_call.1} parent=1 // loop_footer
      %s24 = sadd.s32 1, %s20
    $region7: #{tpu_custom_call.1} parent=1 // loop_footer_branch
      %19 = sbr.rel target = $region3
    $region8: #{tpu_custom_call.1} parent=1 // loop_exit
      _
    %1431 = vsyncpa [#allocation6], 1
    %s1432 = scalar_lea.sflag [#allocation6], 1
    %1433 = vsyncpa %s1432, 1

</llo_original>
